<compile_context>
chip_gen: v6e
topology: v6e:2x2x1
jax: 0.10.0
libtpu: 0.0.40
codegen_flags: <defaults>
</compile_context>

<pallas_src>
import math
from functools import partial

import jax
import jax.numpy as jnp
from jax.experimental import pallas as pl
from jax.experimental.pallas import tpu as pltpu


# ----------------------------------------------------------------------------
# tiling helpers
# ----------------------------------------------------------------------------
def _round_up(x, m):
    return (x + m - 1) // m * m


def _row_tiles(m, max_tm=512, min_grid=2):
    """Pick a row tile: prefer large tiles, keep >=2 grid steps when feasible."""
    m8 = _round_up(max(m, 8), 8)
    tm = min(max_tm, m8)
    while tm > 8 and -(-m8 // tm) < min_grid:     # cdiv(m8, tm) < min_grid
        tm = _round_up(tm // 2, 8)
    m_pad = _round_up(m8, tm)
    return tm, m_pad


# ----------------------------------------------------------------------------
# Kernel 1: fused [1x1 conv (no bias) + folded BN + attention fuse]
#   t = x @ w1 * s1 + b1
#   z = sigmoid(concat([t, y]) @ w_att + b_att)
#   out = t * z[:, 0] + y * z[:, 1]
# ----------------------------------------------------------------------------
def _conv1x1_bn_att_kernel(x_ref, y_ref, w1_ref, s1_ref, b1_ref,
                           wa_ref, ba_ref, o_ref):
    t = jnp.dot(x_ref[...], w1_ref[...], preferred_element_type=jnp.float32)
    t = t * s1_ref[...] + b1_ref[...]                       # f32 epilogue
    y = y_ref[...].astype(jnp.float32)
    z = jnp.dot(jnp.concatenate([t, y], axis=-1), wa_ref[...],
                preferred_element_type=jnp.float32)
    z = jax.nn.sigmoid(z + ba_ref[...])
    o_ref[...] = (t * z[:, 0:1] + y * z[:, 1:2]).astype(o_ref.dtype)


def conv1x1_bn_att(x2d, y2d, w1, s1, b1, wa, ba):
    m, cin = x2d.shape
    mid = w1.shape[1]
    tm, m_pad = _row_tiles(m)
    if m_pad != m:
        x2d = jnp.pad(x2d, ((0, m_pad - m), (0, 0)))
        y2d = jnp.pad(y2d, ((0, m_pad - m), (0, 0)))
    out = pl.pallas_call(
        _conv1x1_bn_att_kernel,
        out_shape=jax.ShapeDtypeStruct((m_pad, mid), jnp.float32),
        grid_spec=pltpu.PrefetchScalarGridSpec(
            num_scalar_prefetch=0,
            grid=(m_pad // tm,),
            in_specs=[
                pl.BlockSpec((tm, cin), lambda i: (i, 0)),
                pl.BlockSpec((tm, mid), lambda i: (i, 0)),
                pl.BlockSpec((cin, mid), lambda i: (0, 0)),
                pl.BlockSpec((1, mid), lambda i: (0, 0)),
                pl.BlockSpec((1, mid), lambda i: (0, 0)),
                pl.BlockSpec((2 * mid, 2), lambda i: (0, 0)),
                pl.BlockSpec((1, 2), lambda i: (0, 0)),
            ],
            out_specs=pl.BlockSpec((tm, mid), lambda i: (i, 0)),
        ),
        compiler_params=pltpu.CompilerParams(dimension_semantics=("parallel",)),
    )(x2d, y2d, w1, s1, b1, wa, ba)
    return out[:m] if m_pad != m else out


# ----------------------------------------------------------------------------
# Kernel 1b: plain 1x1 conv + folded BN (fuse=False path)
# ----------------------------------------------------------------------------
def _conv1x1_bn_kernel(x_ref, w1_ref, s1_ref, b1_ref, o_ref):
    t = jnp.dot(x_ref[...], w1_ref[...], preferred_element_type=jnp.float32)
    o_ref[...] = (t * s1_ref[...] + b1_ref[...]).astype(o_ref.dtype)


def conv1x1_bn(x2d, w1, s1, b1):
    m, cin = x2d.shape
    mid = w1.shape[1]
    tm, m_pad = _row_tiles(m)
    if m_pad != m:
        x2d = jnp.pad(x2d, ((0, m_pad - m), (0, 0)))
    out = pl.pallas_call(
        _conv1x1_bn_kernel,
        out_shape=jax.ShapeDtypeStruct((m_pad, mid), jnp.float32),
        grid_spec=pltpu.PrefetchScalarGridSpec(
            num_scalar_prefetch=0,
            grid=(m_pad // tm,),
            in_specs=[
                pl.BlockSpec((tm, cin), lambda i: (i, 0)),
                pl.BlockSpec((cin, mid), lambda i: (0, 0)),
                pl.BlockSpec((1, mid), lambda i: (0, 0)),
                pl.BlockSpec((1, mid), lambda i: (0, 0)),
            ],
            out_specs=pl.BlockSpec((tm, mid), lambda i: (i, 0)),
        ),
        compiler_params=pltpu.CompilerParams(dimension_semantics=("parallel",)),
    )(x2d, w1, s1, b1)
    return out[:m] if m_pad != m else out


# ----------------------------------------------------------------------------
# Kernel 2: 3x3 conv (padding=1, no bias) + folded BN, NO im2col in HBM.
# The wrapper zero-pads the image and flattens padded spatial positions onto
# the row axis: xflat (N, (H+2)*(W+2)+2, C).  For an output position at padded
# flat index q, its 9 taps live at rows q + kh*(W+2) + kw.  The kernel builds
# them as contiguous row slices of the per-image VMEM block, concatenates
# along lanes and runs a single K=9*C matmul.  Two junk columns per image row
# are computed and sliced off in the wrapper (fused with the final transpose).
# ----------------------------------------------------------------------------
def _make_conv3x3_bn_kernel(width, chunks):
    wp = width + 2
    offs = [kh * wp + kw for kh in range(3) for kw in range(3)]
    halo = 2 * wp + 2

    def kernel(x_ref, w_ref, s_ref, b_ref, o_ref):
        wmat = w_ref[...]
        scale = s_ref[...]
        shift = b_ref[...]
        for s0, tq in chunks:                         # static, few chunks
            slab = x_ref[0, s0:s0 + tq + halo, :].astype(jnp.float32)
            cols = jnp.concatenate([slab[d:d + tq, :] for d in offs], axis=-1)
            acc = jnp.dot(cols, wmat, preferred_element_type=jnp.float32)
            o_ref[0, s0:s0 + tq, :] = acc * scale + shift

    return kernel


def conv3x3_bn(x_nhwc, w2_2d, scale, shift, mxu_dtype=jnp.float32):
    n, h, w, c = x_nhwc.shape
    cout = w2_2d.shape[-1]
    wp = w + 2
    q = h * wp                               # rows computed per image
    r = (h + 2) * wp + 2                     # input rows incl. halo slack

    xpad = jnp.pad(x_nhwc, ((0, 0), (1, 1), (1, 1), (0, 0)))
    xflat = xpad.reshape(n, (h + 2) * wp, c)
    xflat = jnp.pad(xflat, ((0, 0), (0, 2), (0, 0))).astype(mxu_dtype)

    # chunk the per-image rows so the (tq, 9*C) column block stays VMEM-friendly
    max_chunk = 512
    if q <= max_chunk:
        chunks = [(0, q)]
    else:
        chunks = [(s, min(max_chunk, q - s)) for s in range(0, q, max_chunk)]
    kernel = _make_conv3x3_bn_kernel(w, chunks)

    out = pl.pallas_call(
        kernel,
        out_shape=jax.ShapeDtypeStruct((n, q, cout), jnp.float32),
        grid_spec=pltpu.PrefetchScalarGridSpec(
            num_scalar_prefetch=0,
            grid=(n,),
            in_specs=[
                pl.BlockSpec((1, r, c), lambda i: (i, 0, 0)),
                pl.BlockSpec((9 * c, cout), lambda i: (0, 0)),
                pl.BlockSpec((1, cout), lambda i: (0, 0)),
                pl.BlockSpec((1, cout), lambda i: (0, 0)),
            ],
            out_specs=pl.BlockSpec((1, q, cout), lambda i: (i, 0, 0)),
        ),
        compiler_params=pltpu.CompilerParams(dimension_semantics=("parallel",)),
    )(xflat, w2_2d, scale, shift)
    # drop the 2 junk columns per row (fuses with the caller's transpose)
    return out.reshape(n, h, wp, cout)[:, :, :w, :]


# ----------------------------------------------------------------------------
# JAX glue (nearest resize / BN fold / init / forward)
# ----------------------------------------------------------------------------
def nearest_resize_nhwc(x, out_h, out_w):
    # matches F.interpolate(mode='nearest'): src = floor(dst * in / out)
    n, h, w, c = x.shape
    rows = (jnp.arange(out_h) * h) // out_h
    cols = (jnp.arange(out_w) * w) // out_w
    return x[:, rows][:, :, cols]


def bn_fold(gamma, beta, mean, var, eps=1e-5):
    scale = gamma / jnp.sqrt(var + eps)
    shift = beta - mean * scale
    return scale.reshape(1, -1), shift.reshape(1, -1)


def kaiming_uniform(key, shape, fan_in, a=1.0):
    bound = math.sqrt(6.0 / ((1.0 + a * a) * fan_in))
    return jax.random.uniform(key, shape, jnp.float32, -bound, bound)


def init_abf_params(key, in_channel, mid_channel, out_channel, fuse):
    ks = jax.random.split(key, 4)
    # conv1: 1x1 (in -> mid), kaiming_uniform(a=1), stored as (Cin, Cmid)
    w1 = kaiming_uniform(ks[0], (in_channel, mid_channel), fan_in=in_channel)
    # conv2: 3x3 (mid -> out), kaiming_uniform(a=1), stored tap-major as
    # (9, Cmid, Cout) then flattened to (9*Cmid, Cout).  To load a PyTorch
    # checkpoint: w2[kh*3+kw, ci, co] = w_pt[co, ci, kh, kw].
    w2 = kaiming_uniform(ks[1], (9, mid_channel, out_channel),
                         fan_in=9 * mid_channel)
    bn1_scale, bn1_shift = bn_fold(jnp.ones(mid_channel), jnp.zeros(mid_channel),
                                   jnp.zeros(mid_channel), jnp.ones(mid_channel))
    bn2_scale, bn2_shift = bn_fold(jnp.ones(out_channel), jnp.zeros(out_channel),
                                   jnp.zeros(out_channel), jnp.ones(out_channel))
    params = dict(w1=w1, w2_2d=w2.reshape(9 * mid_channel, out_channel),
                  bn1_scale=bn1_scale, bn1_shift=bn1_shift,
                  bn2_scale=bn2_scale, bn2_shift=bn2_shift,
                  att_w=None, att_b=None)
    if fuse:
        # att_conv: 1x1 (2*mid -> 2), default PyTorch conv init, rows [wx; wy]
        fan_in = 2 * mid_channel
        att_w = kaiming_uniform(ks[2], (2 * mid_channel, 2), fan_in=fan_in,
                                a=math.sqrt(5.0))
        b_bound = 1.0 / math.sqrt(fan_in)
        att_b = jax.random.uniform(ks[3], (1, 2), jnp.float32, -b_bound, b_bound)
        params.update(att_w=att_w, att_b=att_b)
    return params


def abf_forward_nhwc(params, x, y=None, shape=None, out_shape=None,
                     mxu_dtype=jnp.bfloat16):
    """ABF forward, NHWC in / NHWC out (no layout transposes)."""
    n, h, w, c_in = x.shape
    mid = params["w1"].shape[1]
    w1 = params["w1"].astype(mxu_dtype)
    x2d = x.reshape(n * h * w, c_in).astype(mxu_dtype)

    if params["att_w"] is not None:
        yr = nearest_resize_nhwc(y, shape, shape)            # (n, h, w, mid)
        y2d = yr.reshape(n * h * w, mid).astype(mxu_dtype)
        fused = conv1x1_bn_att(x2d, y2d, w1,
                               params["bn1_scale"], params["bn1_shift"],
                               params["att_w"], params["att_b"])
        xm = fused.reshape(n, h, w, mid)
    else:
        xm = conv1x1_bn(x2d, w1, params["bn1_scale"], params["bn1_shift"]
                        ).reshape(n, h, w, mid)

    if xm.shape[2] != out_shape:                             # spatial (width)
        xm = nearest_resize_nhwc(xm, out_shape, out_shape)

    y_out = conv3x3_bn(xm, params["w2_2d"],
                       params["bn2_scale"], params["bn2_shift"],
                       mxu_dtype=mxu_dtype)
    return y_out, xm


@partial(jax.jit, static_argnames=("shape", "out_shape", "mxu_dtype"))
def abf_forward(params, x_nchw, y_nchw=None, *, shape=None, out_shape=None,
                mxu_dtype=jnp.bfloat16):
    """PyTorch-facing NCHW wrapper (returns (conv2 output, fused residual))."""
    x = jnp.transpose(x_nchw, (0, 2, 3, 1))
    y = None if y_nchw is None else jnp.transpose(y_nchw, (0, 2, 3, 1))
    out, xm = abf_forward_nhwc(params, x, y, shape, out_shape, mxu_dtype)
    return jnp.transpose(out, (0, 3, 1, 2)), jnp.transpose(xm, (0, 3, 1, 2))


if __name__ == "__main__":
    N = 2
    in_channel, mid_channel, out_channel = 8, 8, 8
    H = W = 16
    y_spatial = 8          # residual comes in at a coarser resolution
    shape = 16             # y is nearest-resized to (shape, shape) == (H, W)
    out_shape = 8          # x is nearest-resized to (out_shape, out_shape)

    key = jax.random.PRNGKey(0)
    kx, ky, kp, kp2 = jax.random.split(key, 4)
    x = jax.random.normal(kx, (N, in_channel, H, W), jnp.float32)
    y_res = jax.random.normal(ky, (N, mid_channel, y_spatial, y_spatial),
                              jnp.float32)

    # fuse=True path (conv1+BN+attention fused kernel, resize, conv3x3+BN)
    params = init_abf_params(kp, in_channel, mid_channel, out_channel, fuse=True)
    out_y, out_x = abf_forward(params, x, y_res, shape=shape, out_shape=out_shape)
    jax.block_until_ready((out_y, out_x))
    assert out_y.shape == (N, out_channel, out_shape, out_shape), out_y.shape
    assert out_x.shape == (N, mid_channel, out_shape, out_shape), out_x.shape
    assert bool(jnp.all(jnp.isfinite(out_y))) and bool(jnp.all(jnp.isfinite(out_x)))

    # fuse=False path (no attention, no resize since out_shape == H)
    params_nf = init_abf_params(kp2, in_channel, mid_channel, out_channel,
                                fuse=False)
    out_y2, out_x2 = abf_forward(params_nf, x, out_shape=H)
    jax.block_until_ready((out_y2, out_x2))
    assert out_y2.shape == (N, out_channel, H, W), out_y2.shape
    assert out_x2.shape == (N, mid_channel, H, W), out_x2.shape

    print("KERNEL_OK")
</pallas_src>

<mosaic_0001>
module attributes {stable_mosaic.version = 11 : i64} {
  func.func @_conv1x1_bn_att_kernel(%arg0: i32, %arg1: memref<256x8xbf16, #tpu.memory_space<vmem>>, %arg2: memref<256x8xbf16, #tpu.memory_space<vmem>>, %arg3: memref<8x8xbf16, #tpu.memory_space<vmem>>, %arg4: memref<1x8xf32, #tpu.memory_space<vmem>>, %arg5: memref<1x8xf32, #tpu.memory_space<vmem>>, %arg6: memref<16x2xf32, #tpu.memory_space<vmem>>, %arg7: memref<1x2xf32, #tpu.memory_space<vmem>>, %arg8: memref<256x8xf32, #tpu.memory_space<vmem>>) attributes {dimension_semantics = [#tpu.dimension_semantics<parallel>], iteration_bounds = array<i64: 2>, scalar_prefetch = 0 : i64, scratch_operands = 0 : i64, tpu.core_type = #tpu.core_type<tc>, window_params = [{transform_indices = @transform_0, window_bounds = array<i64: 256, 8>}, {transform_indices = @transform_1, window_bounds = array<i64: 256, 8>}, {pipeline_mode = #tpu.pipeline_mode<synchronous>, transform_indices = @transform_2, window_bounds = array<i64: 8, 8>}, {pipeline_mode = #tpu.pipeline_mode<synchronous>, transform_indices = @transform_3, window_bounds = array<i64: 1, 8>}, {pipeline_mode = #tpu.pipeline_mode<synchronous>, transform_indices = @transform_4, window_bounds = array<i64: 1, 8>}, {pipeline_mode = #tpu.pipeline_mode<synchronous>, transform_indices = @transform_5, window_bounds = array<i64: 16, 2>}, {pipeline_mode = #tpu.pipeline_mode<synchronous>, transform_indices = @transform_6, window_bounds = array<i64: 1, 2>}, {transform_indices = @transform_7, window_bounds = array<i64: 256, 8>}]} {
    %c0 = arith.constant 0 : index
    %c0_0 = arith.constant 0 : index
    %0 = vector.load %arg1[%c0, %c0_0] : memref<256x8xbf16, #tpu.memory_space<vmem>>, vector<256x8xbf16>
    %c0_1 = arith.constant 0 : index
    %c0_2 = arith.constant 0 : index
    %1 = vector.load %arg3[%c0_1, %c0_2] : memref<8x8xbf16, #tpu.memory_space<vmem>>, vector<8x8xbf16>
    %cst = arith.constant dense<0.000000e+00> : vector<256x8xf32>
    %2 = tpu.matmul %0, %1, %cst {dimension_numbers = #tpu.dot_dimension_numbers<[1], [0], [0], [1], [0, 0, 1, 1], [], []>} : vector<256x8xbf16>, vector<8x8xbf16>, vector<256x8xf32> -> vector<256x8xf32>
    %c0_3 = arith.constant 0 : index
    %c0_4 = arith.constant 0 : index
    %3 = vector.load %arg4[%c0_3, %c0_4] : memref<1x8xf32, #tpu.memory_space<vmem>>, vector<1x8xf32>
    %4 = vector.broadcast %3 : vector<1x8xf32> to vector<256x8xf32>
    %5 = arith.mulf %2, %4 : vector<256x8xf32>
    %c0_5 = arith.constant 0 : index
    %c0_6 = arith.constant 0 : index
    %6 = vector.load %arg5[%c0_5, %c0_6] : memref<1x8xf32, #tpu.memory_space<vmem>>, vector<1x8xf32>
    %7 = vector.broadcast %6 : vector<1x8xf32> to vector<256x8xf32>
    %8 = arith.addf %5, %7 : vector<256x8xf32>
    %c0_7 = arith.constant 0 : index
    %c0_8 = arith.constant 0 : index
    %9 = vector.load %arg2[%c0_7, %c0_8] : memref<256x8xbf16, #tpu.memory_space<vmem>>, vector<256x8xbf16>
    %10 = arith.extf %9 : vector<256x8xbf16> to vector<256x8xf32>
    %11 = tpu.concatenate %8, %10 in 1 : vector<256x8xf32>, vector<256x8xf32> -> vector<256x16xf32>
    %c0_9 = arith.constant 0 : index
    %c0_10 = arith.constant 0 : index
    %12 = vector.load %arg6[%c0_9, %c0_10] : memref<16x2xf32, #tpu.memory_space<vmem>>, vector<16x2xf32>
    %cst_11 = arith.constant dense<0.000000e+00> : vector<256x2xf32>
    %13 = tpu.matmul %11, %12, %cst_11 {dimension_numbers = #tpu.dot_dimension_numbers<[1], [0], [0], [1], [0, 0, 1, 1], [], []>} : vector<256x16xf32>, vector<16x2xf32>, vector<256x2xf32> -> vector<256x2xf32>
    %c0_12 = arith.constant 0 : index
    %c0_13 = arith.constant 0 : index
    %14 = vector.load %arg7[%c0_12, %c0_13] : memref<1x2xf32, #tpu.memory_space<vmem>>, vector<1x2xf32>
    %15 = vector.broadcast %14 : vector<1x2xf32> to vector<256x2xf32>
    %16 = arith.addf %13, %15 : vector<256x2xf32>
    %17 = arith.negf %16 : vector<256x2xf32>
    %18 = math.exp %17 : vector<256x2xf32>
    %cst_14 = arith.constant 1.000000e+00 : f32
    %19 = vector.broadcast %cst_14 : f32 to vector<256x2xf32>
    %20 = arith.addf %19, %18 : vector<256x2xf32>
    %21 = arith.divf %19, %20 : vector<256x2xf32>
    %22 = vector.extract_strided_slice %21 {offsets = [0, 0], sizes = [256, 1], strides = [1, 1]} : vector<256x2xf32> to vector<256x1xf32>
    %23 = vector.broadcast %22 : vector<256x1xf32> to vector<256x8xf32>
    %24 = arith.mulf %8, %23 : vector<256x8xf32>
    %25 = vector.extract_strided_slice %21 {offsets = [0, 1], sizes = [256, 1], strides = [1, 1]} : vector<256x2xf32> to vector<256x1xf32>
    %26 = vector.broadcast %25 : vector<256x1xf32> to vector<256x8xf32>
    %27 = arith.mulf %10, %26 : vector<256x8xf32>
    %28 = arith.addf %24, %27 : vector<256x8xf32>
    %c0_15 = arith.constant 0 : index
    %c0_16 = arith.constant 0 : index
    %29 = vector.load %arg8[%c0_15, %c0_16] : memref<256x8xf32, #tpu.memory_space<vmem>>, vector<256x8xf32>
    tpu.vector_store %arg8[%c0_15, %c0_16], %28 {strides = array<i32>} : memref<256x8xf32, #tpu.memory_space<vmem>>, vector<256x8xf32>,
    return
  }
  func.func @transform_0(%arg0: i32) -> (i32, i32) {
    %c0_i32 = arith.constant 0 : i32
    %c0_i32_0 = arith.constant 0 : i32
    return %arg0, %c0_i32 : i32, i32
  }
  func.func @transform_1(%arg0: i32) -> (i32, i32) {
    %c0_i32 = arith.constant 0 : i32
    %c0_i32_0 = arith.constant 0 : i32
    return %arg0, %c0_i32 : i32, i32
  }
  func.func @transform_2(%arg0: i32) -> (i32, i32) {
    %c0_i32 = arith.constant 0 : i32
    %c0_i32_0 = arith.constant 0 : i32
    %c0_i32_1 = arith.constant 0 : i32
    return %c0_i32, %c0_i32_0 : i32, i32
  }
  func.func @transform_3(%arg0: i32) -> (i32, i32) {
    %c0_i32 = arith.constant 0 : i32
    %c0_i32_0 = arith.constant 0 : i32
    %c0_i32_1 = arith.constant 0 : i32
    return %c0_i32, %c0_i32_0 : i32, i32
  }
  func.func @transform_4(%arg0: i32) -> (i32, i32) {
    %c0_i32 = arith.constant 0 : i32
    %c0_i32_0 = arith.constant 0 : i32
    %c0_i32_1 = arith.constant 0 : i32
    return %c0_i32, %c0_i32_0 : i32, i32
  }
  func.func @transform_5(%arg0: i32) -> (i32, i32) {
    %c0_i32 = arith.constant 0 : i32
    %c0_i32_0 = arith.constant 0 : i32
    %c0_i32_1 = arith.constant 0 : i32
    return %c0_i32, %c0_i32_0 : i32, i32
  }
  func.func @transform_6(%arg0: i32) -> (i32, i32) {
    %c0_i32 = arith.constant 0 : i32
    %c0_i32_0 = arith.constant 0 : i32
    %c0_i32_1 = arith.constant 0 : i32
    return %c0_i32, %c0_i32_0 : i32, i32
  }
  func.func @transform_7(%arg0: i32) -> (i32, i32) {
    %c0_i32 = arith.constant 0 : i32
    %c0_i32_0 = arith.constant 0 : i32
    return %arg0, %c0_i32 : i32, i32
  }
}

module attributes {stable_mosaic.version = 11 : i64} {
  func.func @kernel(%arg0: i32, %arg1: memref<1x102x8xbf16, #tpu.memory_space<vmem>>, %arg2: memref<72x8xf32, #tpu.memory_space<vmem>>, %arg3: memref<1x8xf32, #tpu.memory_space<vmem>>, %arg4: memref<1x8xf32, #tpu.memory_space<vmem>>, %arg5: memref<1x80x8xf32, #tpu.memory_space<vmem>>) attributes {dimension_semantics = [#tpu.dimension_semantics<parallel>], iteration_bounds = array<i64: 2>, scalar_prefetch = 0 : i64, scratch_operands = 0 : i64, tpu.core_type = #tpu.core_type<tc>, window_params = [{transform_indices = @transform_0, window_bounds = array<i64: 1, 102, 8>}, {pipeline_mode = #tpu.pipeline_mode<synchronous>, transform_indices = @transform_1, window_bounds = array<i64: 72, 8>}, {pipeline_mode = #tpu.pipeline_mode<synchronous>, transform_indices = @transform_2, window_bounds = array<i64: 1, 8>}, {pipeline_mode = #tpu.pipeline_mode<synchronous>, transform_indices = @transform_3, window_bounds = array<i64: 1, 8>}, {transform_indices = @transform_4, window_bounds = array<i64: 1, 80, 8>}]} {
    %c0 = arith.constant 0 : index
    %c0_0 = arith.constant 0 : index
    %0 = vector.load %arg2[%c0, %c0_0] : memref<72x8xf32, #tpu.memory_space<vmem>>, vector<72x8xf32>
    %c0_1 = arith.constant 0 : index
    %c0_2 = arith.constant 0 : index
    %1 = vector.load %arg3[%c0_1, %c0_2] : memref<1x8xf32, #tpu.memory_space<vmem>>, vector<1x8xf32>
    %c0_3 = arith.constant 0 : index
    %c0_4 = arith.constant 0 : index
    %2 = vector.load %arg4[%c0_3, %c0_4] : memref<1x8xf32, #tpu.memory_space<vmem>>, vector<1x8xf32>
    %c0_5 = arith.constant 0 : index
    %c0_6 = arith.constant 0 : index
    %c0_7 = arith.constant 0 : index
    %3 = vector.load %arg1[%c0_5, %c0_6, %c0_7] : memref<1x102x8xbf16, #tpu.memory_space<vmem>>, vector<1x102x8xbf16>
    %4 = vector.shape_cast %3 : vector<1x102x8xbf16> to vector<102x8xbf16>
    %5 = arith.extf %4 : vector<102x8xbf16> to vector<102x8xf32>
    %6 = vector.extract_strided_slice %5 {offsets = [0, 0], sizes = [80, 8], strides = [1, 1]} : vector<102x8xf32> to vector<80x8xf32>
    %7 = vector.extract_strided_slice %5 {offsets = [1, 0], sizes = [80, 8], strides = [1, 1]} : vector<102x8xf32> to vector<80x8xf32>
    %8 = vector.extract_strided_slice %5 {offsets = [2, 0], sizes = [80, 8], strides = [1, 1]} : vector<102x8xf32> to vector<80x8xf32>
    %9 = vector.extract_strided_slice %5 {offsets = [10, 0], sizes = [80, 8], strides = [1, 1]} : vector<102x8xf32> to vector<80x8xf32>
    %10 = vector.extract_strided_slice %5 {offsets = [11, 0], sizes = [80, 8], strides = [1, 1]} : vector<102x8xf32> to vector<80x8xf32>
    %11 = vector.extract_strided_slice %5 {offsets = [12, 0], sizes = [80, 8], strides = [1, 1]} : vector<102x8xf32> to vector<80x8xf32>
    %12 = vector.extract_strided_slice %5 {offsets = [20, 0], sizes = [80, 8], strides = [1, 1]} : vector<102x8xf32> to vector<80x8xf32>
    %13 = vector.extract_strided_slice %5 {offsets = [21, 0], sizes = [80, 8], strides = [1, 1]} : vector<102x8xf32> to vector<80x8xf32>
    %14 = vector.extract_strided_slice %5 {offsets = [22, 0], sizes = [80, 8], strides = [1, 1]} : vector<102x8xf32> to vector<80x8xf32>
    %15 = tpu.concatenate %6, %7, %8, %9, %10, %11, %12, %13, %14 in 1 : vector<80x8xf32>, vector<80x8xf32>, vector<80x8xf32>, vector<80x8xf32>, vector<80x8xf32>, vector<80x8xf32>, vector<80x8xf32>, vector<80x8xf32>, vector<80x8xf32> -> vector<80x72xf32>
    %cst = arith.constant dense<0.000000e+00> : vector<80x8xf32>
    %16 = tpu.matmul %15, %0, %cst {dimension_numbers = #tpu.dot_dimension_numbers<[1], [0], [0], [1], [0, 0, 1, 1], [], []>} : vector<80x72xf32>, vector<72x8xf32>, vector<80x8xf32> -> vector<80x8xf32>
    %17 = vector.broadcast %1 : vector<1x8xf32> to vector<80x8xf32>
    %18 = arith.mulf %16, %17 : vector<80x8xf32>
    %19 = vector.broadcast %2 : vector<1x8xf32> to vector<80x8xf32>
    %20 = arith.addf %18, %19 : vector<80x8xf32>
    %c0_8 = arith.constant 0 : index
    %c0_9 = arith.constant 0 : index
    %c0_10 = arith.constant 0 : index
    %21 = vector.load %arg5[%c0_8, %c0_9, %c0_10] : memref<1x80x8xf32, #tpu.memory_space<vmem>>, vector<1x80x8xf32>
    %22 = vector.shape_cast %21 : vector<1x80x8xf32> to vector<80x8xf32>
    %23 = vector.shape_cast %20 : vector<80x8xf32> to vector<1x80x8xf32>
    tpu.vector_store %arg5[%c0_8, %c0_9, %c0_10], %23 {strides = array<i32>} : memref<1x80x8xf32, #tpu.memory_space<vmem>>, vector<1x80x8xf32>,
    return
  }
  func.func @transform_0(%arg0: i32) -> (i32, i32, i32) {
    %c0_i32 = arith.constant 0 : i32
    %c0_i32_0 = arith.constant 0 : i32
    %c0_i32_1 = arith.constant 0 : i32
    return %arg0, %c0_i32, %c0_i32_0 : i32, i32, i32
  }
  func.func @transform_1(%arg0: i32) -> (i32, i32) {
    %c0_i32 = arith.constant 0 : i32
    %c0_i32_0 = arith.constant 0 : i32
    %c0_i32_1 = arith.constant 0 : i32
    return %c0_i32, %c0_i32_0 : i32, i32
  }
  func.func @transform_2(%arg0: i32) -> (i32, i32) {
    %c0_i32 = arith.constant 0 : i32
    %c0_i32_0 = arith.constant 0 : i32
    %c0_i32_1 = arith.constant 0 : i32
    return %c0_i32, %c0_i32_0 : i32, i32
  }
  func.func @transform_3(%arg0: i32) -> (i32, i32) {
    %c0_i32 = arith.constant 0 : i32
    %c0_i32_0 = arith.constant 0 : i32
    %c0_i32_1 = arith.constant 0 : i32
    return %c0_i32, %c0_i32_0 : i32, i32
  }
  func.func @transform_4(%arg0: i32) -> (i32, i32, i32) {
    %c0_i32 = arith.constant 0 : i32
    %c0_i32_0 = arith.constant 0 : i32
    %c0_i32_1 = arith.constant 0 : i32
    return %arg0, %c0_i32, %c0_i32_0 : i32, i32, i32
  }
}

</mosaic_0001>

<llo_original>
// kernel: abf_forward.2
$region0: #{abf_forward.2}
  #allocation0 [shape = 'u32[]', space=smem, size = 0x4, offset = 0x4, fixed_abs, tag = 'smem constant byte address 0x4 - core index']
  #allocation1 [shape = 'u32[144,128]{1,0:T(1,128)}', space=vmem, size = 0x12000, scoped, tag = 'internal scratch']
  %s0 = inlined_call_operand.vmem [shape: bf16[512,8], index: 0, kind: input, shape index: {}]
  %s1 = inlined_call_operand.vmem [shape: bf16[512,8], index: 1, kind: input, shape index: {}]
  %s2 = inlined_call_operand.vmem [shape: bf16[8,8], index: 2, kind: input, shape index: {}]
  %s3 = inlined_call_operand.vmem [shape: f32[1,8], index: 3, kind: input, shape index: {}]
  %s4 = inlined_call_operand.vmem [shape: f32[1,8], index: 4, kind: input, shape index: {}]
  %s5 = inlined_call_operand.vmem [shape: f32[16,2], index: 5, kind: input, shape index: {}]
  %s6 = inlined_call_operand.vmem [shape: f32[1,2], index: 6, kind: input, shape index: {}]
  %s7 = inlined_call_operand.vmem [shape: f32[512,8], index: 7, kind: output, shape index: {}]
  %s8 = sld [smem:[#allocation0]]
  $region61: #{abf_forward.2} parent=0
    _
  %s10 = ssub.s32 1, %s8
  %s11 = scalar_select 0, %s10, %s8
  loop: start=0, step=1, limit=4
  $region2: #{abf_forward.2} parent=0 // loop_pre_header
    _
  $region3: #{abf_forward.2} parent=0 // loop_header
    %s13 = sphi 0, %s17
    %p14 = scmp.ge.s32.totalorder %s13, 4
    %s23 = sphi 0, %s25
    %s26 = sphi 0, %s23
    %s27 = sphi 0, %s26
    %s43 = sphi 0, %s27
    %s49 = sphi 0, %s51
    %s52 = sphi 0, %s49
    %s53 = sphi 0, %s52
    %s69 = sphi 0, %s53
    %s73 = sphi 0, %s73
    %s75 = sphi 0, %s73
    %s76 = sphi 0, %s75
    %s90 = sphi 0, %s76
    %s94 = sphi 0, %s94
    %s96 = sphi 0, %s94
    %s97 = sphi 0, %s96
    %s111 = sphi 0, %s97
    %s115 = sphi 0, %s115
    %s117 = sphi 0, %s115
    %s118 = sphi 0, %s117
    %s132 = sphi 0, %s118
    %s136 = sphi 0, %s136
    %s138 = sphi 0, %s136
    %s139 = sphi 0, %s138
    %s153 = sphi 0, %s139
    %s157 = sphi 0, %s157
    %s159 = sphi 0, %s157
    %s160 = sphi 0, %s159
    %s174 = sphi 0, %s160
    %s180 = sphi 0, %s182
    %s183 = sphi 0, %s180
    %s184 = sphi 0, %s183
    %s200 = sphi 0, %s184
  $region4: #{abf_forward.2} parent=0 // loop_header_branch
    %16 = sbr.rel (%p14) target = $region8
  $region5: #{abf_forward.2} parent=0 // loop_body
    %s18 = ssub.s32 %s13, 1
    %s19 = ssub.s32 %s13, 2
    %s20 = sadd.s32 %s13, 1
    %s21 = ssub.s32 %s13, %s20
    %p22 = scmp.eq.s32.totalorder %s21, 0
    %s24 = sadd.s32 %s23, 1
    %s25 = scalar_select %p22, %s23, %s24
    %p28 = pneg %p22
    %p29 = scmp.eq.s32.totalorder %s13, 1
    %p30 = por %p28, %p29
    %p31 = scmp.ne.s32.totalorder %s23, %s26
    %p32 = scmp.eq.s32.totalorder %s13, 0
    %p33 = por %p31, %p32
    %p34 = scmp.ne.s32.totalorder %s23, %s26
    %p35 = scmp.eq.s32.totalorder %s18, 1
    %p36 = por %p34, %p35
    %p37 = scmp.ne.s32.totalorder %s26, %s27
    %p38 = scmp.eq.s32.totalorder %s18, 0
    %p39 = por %p37, %p38
    %p40 = scmp.ne.s32.totalorder %s26, %s27
    %p41 = scmp.eq.s32.totalorder %s19, 1
    %p42 = por %p40, %p41
    %p44 = scmp.ne.s32.totalorder %s27, %s43
    %p45 = scmp.eq.s32.totalorder %s19, 0
    %p46 = por %p44, %p45
    %s47 = ssub.s32 %s13, %s20
    %p48 = scmp.eq.s32.totalorder %s47, 0
    %s50 = sadd.s32 %s49, 1
    %s51 = scalar_select %p48, %s49, %s50
    %p54 = pneg %p48
    %p55 = scmp.eq.s32.totalorder %s13, 1
    %p56 = por %p54, %p55
    %p57 = scmp.ne.s32.totalorder %s49, %s52
    %p58 = scmp.eq.s32.totalorder %s13, 0
    %p59 = por %p57, %p58
    %p60 = scmp.ne.s32.totalorder %s49, %s52
    %p61 = scmp.eq.s32.totalorder %s18, 1
    %p62 = por %p60, %p61
    %p63 = scmp.ne.s32.totalorder %s52, %s53
    %p64 = scmp.eq.s32.totalorder %s18, 0
    %p65 = por %p63, %p64
    %p66 = scmp.ne.s32.totalorder %s52, %s53
    %p67 = scmp.eq.s32.totalorder %s19, 1
    %p68 = por %p66, %p67
    %p70 = scmp.ne.s32.totalorder %s53, %s69
    %p71 = scmp.eq.s32.totalorder %s19, 0
    %p72 = por %p70, %p71
    %s74 = sadd.s32 %s73, 1
    %p77 = scmp.eq.s32.totalorder %s13, 1
    %p78 = scmp.ne.s32.totalorder %s73, %s75
    %p79 = scmp.eq.s32.totalorder %s13, 0
    %p80 = por %p78, %p79
    %p81 = scmp.ne.s32.totalorder %s73, %s75
    %p82 = scmp.eq.s32.totalorder %s18, 1
    %p83 = por %p81, %p82
    %p84 = scmp.ne.s32.totalorder %s75, %s76
    %p85 = scmp.eq.s32.totalorder %s18, 0
    %p86 = por %p84, %p85
    %p87 = scmp.ne.s32.totalorder %s75, %s76
    %p88 = scmp.eq.s32.totalorder %s19, 1
    %p89 = por %p87, %p88
    %p91 = scmp.ne.s32.totalorder %s76, %s90
    %p92 = scmp.eq.s32.totalorder %s19, 0
    %p93 = por %p91, %p92
    %s95 = sadd.s32 %s94, 1
    %p98 = scmp.eq.s32.totalorder %s13, 1
    %p99 = scmp.ne.s32.totalorder %s94, %s96
    %p100 = scmp.eq.s32.totalorder %s13, 0
    %p101 = por %p99, %p100
    %p102 = scmp.ne.s32.totalorder %s94, %s96
    %p103 = scmp.eq.s32.totalorder %s18, 1
    %p104 = por %p102, %p103
    %p105 = scmp.ne.s32.totalorder %s96, %s97
    %p106 = scmp.eq.s32.totalorder %s18, 0
    %p107 = por %p105, %p106
    %p108 = scmp.ne.s32.totalorder %s96, %s97
    %p109 = scmp.eq.s32.totalorder %s19, 1
    %p110 = por %p108, %p109
    %p112 = scmp.ne.s32.totalorder %s97, %s111
    %p113 = scmp.eq.s32.totalorder %s19, 0
    %p114 = por %p112, %p113
    %s116 = sadd.s32 %s115, 1
    %p119 = scmp.eq.s32.totalorder %s13, 1
    %p120 = scmp.ne.s32.totalorder %s115, %s117
    %p121 = scmp.eq.s32.totalorder %s13, 0
    %p122 = por %p120, %p121
    %p123 = scmp.ne.s32.totalorder %s115, %s117
    %p124 = scmp.eq.s32.totalorder %s18, 1
    %p125 = por %p123, %p124
    %p126 = scmp.ne.s32.totalorder %s117, %s118
    %p127 = scmp.eq.s32.totalorder %s18, 0
    %p128 = por %p126, %p127
    %p129 = scmp.ne.s32.totalorder %s117, %s118
    %p130 = scmp.eq.s32.totalorder %s19, 1
    %p131 = por %p129, %p130
    %p133 = scmp.ne.s32.totalorder %s118, %s132
    %p134 = scmp.eq.s32.totalorder %s19, 0
    %p135 = por %p133, %p134
    %s137 = sadd.s32 %s136, 1
    %p140 = scmp.eq.s32.totalorder %s13, 1
    %p141 = scmp.ne.s32.totalorder %s136, %s138
    %p142 = scmp.eq.s32.totalorder %s13, 0
    %p143 = por %p141, %p142
    %p144 = scmp.ne.s32.totalorder %s136, %s138
    %p145 = scmp.eq.s32.totalorder %s18, 1
    %p146 = por %p144, %p145
    %p147 = scmp.ne.s32.totalorder %s138, %s139
    %p148 = scmp.eq.s32.totalorder %s18, 0
    %p149 = por %p147, %p148
    %p150 = scmp.ne.s32.totalorder %s138, %s139
    %p151 = scmp.eq.s32.totalorder %s19, 1
    %p152 = por %p150, %p151
    %p154 = scmp.ne.s32.totalorder %s139, %s153
    %p155 = scmp.eq.s32.totalorder %s19, 0
    %p156 = por %p154, %p155
    %s158 = sadd.s32 %s157, 1
    %p161 = scmp.eq.s32.totalorder %s13, 1
    %p162 = scmp.ne.s32.totalorder %s157, %s159
    %p163 = scmp.eq.s32.totalorder %s13, 0
    %p164 = por %p162, %p163
    %p165 = scmp.ne.s32.totalorder %s157, %s159
    %p166 = scmp.eq.s32.totalorder %s18, 1
    %p167 = por %p165, %p166
    %p168 = scmp.ne.s32.totalorder %s159, %s160
    %p169 = scmp.eq.s32.totalorder %s18, 0
    %p170 = por %p168, %p169
    %p171 = scmp.ne.s32.totalorder %s159, %s160
    %p172 = scmp.eq.s32.totalorder %s19, 1
    %p173 = por %p171, %p172
    %p175 = scmp.ne.s32.totalorder %s160, %s174
    %p176 = scmp.eq.s32.totalorder %s19, 0
    %p177 = por %p175, %p176
    %s178 = ssub.s32 %s13, %s20
    %p179 = scmp.eq.s32.totalorder %s178, 0
    %s181 = sadd.s32 %s180, 1
    %s182 = scalar_select %p179, %s180, %s181
    %p185 = pneg %p179
    %p186 = scmp.eq.s32.totalorder %s13, 1
    %p187 = por %p185, %p186
    %p188 = scmp.ne.s32.totalorder %s180, %s183
    %p189 = scmp.eq.s32.totalorder %s13, 0
    %p190 = por %p188, %p189
    %p191 = scmp.ne.s32.totalorder %s180, %s183
    %p192 = scmp.eq.s32.totalorder %s18, 1
    %p193 = por %p191, %p192
    %p194 = scmp.ne.s32.totalorder %s183, %s184
    %p195 = scmp.eq.s32.totalorder %s18, 0
    %p196 = por %p194, %p195
    %p197 = scmp.ne.s32.totalorder %s183, %s184
    %p198 = scmp.eq.s32.totalorder %s19, 1
    %p199 = por %p197, %p198
    %p201 = scmp.ne.s32.totalorder %s184, %s200
    %p202 = scmp.eq.s32.totalorder %s19, 0
    %p203 = por %p201, %p202
    %p204 = scmp.le.s32.totalorder 1, %s13
    %p205 = scmp.lt.s32.totalorder %s13, 3
    %p206 = pnand %p204, %p205
    %p207 = pneg %p206
    // Predicated region
    $region9: #{abf_forward.2} parent=5 // pred_check
      _
    $region10: #{abf_forward.2} parent=5 // pred_check_branch
      %209 = sbr.rel (%p206) target = $region12
    $region11: #{abf_forward.2} parent=5 // pred_region
      %s210 = ssub.s32 %s13, 1
      // Predicated region
      $region13: #{abf_forward.2} parent=11 // pred_check
        %p211 = pneg %p86
      $region14: #{abf_forward.2} parent=11 // pred_check_branch
        %213 = sbr.rel (%p211) target = $region16
      $region15: #{abf_forward.2} parent=11 // pred_region
        _
      $region16: #{abf_forward.2} parent=11 // pred_fallthru
        _
      // Predicated region
      $region17: #{abf_forward.2} parent=11 // pred_check
        %p214 = pneg %p107
      $region18: #{abf_forward.2} parent=11 // pred_check_branch
        %216 = sbr.rel (%p214) target = $region20
      $region19: #{abf_forward.2} parent=11 // pred_region
        _
      $region20: #{abf_forward.2} parent=11 // pred_fallthru
        _
      // Predicated region
      $region21: #{abf_forward.2} parent=11 // pred_check
        %p217 = pneg %p128
      $region22: #{abf_forward.2} parent=11 // pred_check_branch
        %219 = sbr.rel (%p217) target = $region24
      $region23: #{abf_forward.2} parent=11 // pred_region
        _
      $region24: #{abf_forward.2} parent=11 // pred_fallthru
        _
      // Predicated region
      $region25: #{abf_forward.2} parent=11 // pred_check
        %p220 = pneg %p149
      $region26: #{abf_forward.2} parent=11 // pred_check_branch
        %222 = sbr.rel (%p220) target = $region28
      $region27: #{abf_forward.2} parent=11 // pred_region
        _
      $region28: #{abf_forward.2} parent=11 // pred_fallthru
        _
      // Predicated region
      $region29: #{abf_forward.2} parent=11 // pred_check
        %p223 = pneg %p170
      $region30: #{abf_forward.2} parent=11 // pred_check_branch
        %225 = sbr.rel (%p223) target = $region32
      $region31: #{abf_forward.2} parent=11 // pred_region
        _
      $region32: #{abf_forward.2} parent=11 // pred_fallthru
        _
    $region12: #{abf_forward.2} parent=5 // pred_fallthru
      _
    %p226 = scmp.lt.s32.totalorder %s13, 2
    // Predicated region
    $region33: #{abf_forward.2} parent=5 // pred_check
      %p227 = pneg %p226
    $region34: #{abf_forward.2} parent=5 // pred_check_branch
      %229 = sbr.rel (%p227) target = $region36
    $region35: #{abf_forward.2} parent=5 // pred_region
      // Predicated region
      $region37: #{abf_forward.2} parent=35 // pred_check
        %p230 = pneg %p33
      $region38: #{abf_forward.2} parent=35 // pred_check_branch
        %232 = sbr.rel (%p230) target = $region40
      $region39: #{abf_forward.2} parent=35 // pred_region
        %s233 = smul.u32 32, %s13
        %p234 = scmp.lt.s32.totalorder %s233, 63
        %s235 = scalar_select %p234, %s233, 63
        %s236 = smul.addr %s235, 4
        %s237 = scalar_lea.vmem %s0, %s236
        %s238 = smul.u32 32, %s13
      $region40: #{abf_forward.2} parent=35 // pred_fallthru
        _
      // Predicated region
      $region41: #{abf_forward.2} parent=35 // pred_check
        %p239 = pneg %p59
      $region42: #{abf_forward.2} parent=35 // pred_check_branch
        %241 = sbr.rel (%p239) target = $region44
      $region43: #{abf_forward.2} parent=35 // pred_region
        %s242 = smul.u32 32, %s13
        %p243 = scmp.lt.s32.totalorder %s242, 63
        %s244 = scalar_select %p243, %s242, 63
        %s245 = smul.addr %s244, 4
        %s246 = scalar_lea.vmem %s1, %s245
        %s247 = smul.u32 32, %s13
      $region44: #{abf_forward.2} parent=35 // pred_fallthru
        _
    $region36: #{abf_forward.2} parent=5 // pred_fallthru
      _
    %p248 = scmp.le.s32.totalorder 1, %s13
    %p249 = scmp.lt.s32.totalorder %s13, 3
    %p250 = pnand %p248, %p249
    %p251 = pneg %p250
    // Predicated region
    $region45: #{abf_forward.2} parent=5 // pred_check
      _
    $region46: #{abf_forward.2} parent=5 // pred_check_branch
      %253 = sbr.rel (%p250) target = $region48
    $region47: #{abf_forward.2} parent=5 // pred_region
      %s254 = ssub.s32 %s13, 1
      %s255 = smul.u32 32, %s18
      %p256 = scmp.lt.s32.totalorder %s255, 63
      %s257 = scalar_select %p256, %s255, 63
      %s258 = smul.addr %s257, 4
      %s259 = scalar_lea.vmem %s0, %s258
      %p260 = pneg %p39
      %p261 = pneg %p36
      %s262 = smul.u32 32, %s18
      %p263 = scmp.lt.s32.totalorder %s262, 63
      %s264 = scalar_select %p263, %s262, 63
      %s265 = smul.addr %s264, 4
      %s266 = scalar_lea.vmem %s1, %s265
      %p267 = pneg %p65
      %p268 = pneg %p62
      %p269 = pneg %p86
      %p270 = pneg %p83
      %p271 = pneg %p107
      %p272 = pneg %p104
      %p273 = pneg %p128
      %p274 = pneg %p125
      %p275 = pneg %p149
      %p276 = pneg %p146
      %p277 = pneg %p170
      %p278 = pneg %p167
      %p279 = pneg %p196
      %p280 = pneg %p193
      %s281 = smul.u32 32, %s18
      %p282 = scmp.lt.s32.totalorder %s281, 63
      %s283 = scalar_select %p282, %s281, 63
      %s284 = smul.addr %s283, 8
      %s285 = scalar_lea.vmem %s7, %s284
      %s286 = smul.u32 32, %s18
      %p287 = scmp.lt.s32.totalorder %s286, 63
      %s288 = scalar_select %p287, %s286, 63
      %s289 = smul.addr %s288, 4
      %s290 = scalar_lea.vmem %s0, %s289
      %s291 = smul.u32 32, %s18
      %s292 = smul.u32 32, %s18
      %p293 = scmp.lt.s32.totalorder %s292, 63
      %s294 = scalar_select %p293, %s292, 63
      %s295 = smul.addr %s294, 4
      %s296 = scalar_lea.vmem %s1, %s295
      %s297 = smul.u32 32, %s18
      %s298 = smul.u32 32, %s18
      %p299 = scmp.lt.s32.totalorder %s298, 63
      %s300 = scalar_select %p299, %s298, 63
      %s301 = smul.addr %s300, 8
      %s302 = scalar_lea.vmem %s7, %s301
      %s303 = smul.u32 32, %s18
      %v305 = vld [vmem:[%s290] sm:$0xf]
      %v306 = vld [vmem:[%s290 + $0x4] sm:$0xf]
      %v307 = vld [vmem:[%s290 + $0x8] sm:$0xf]
      %v308 = vld [vmem:[%s290 + $0xc] sm:$0xf]
      %v309 = vld [vmem:[%s290 + $0x10] sm:$0xf]
      %v310 = vld [vmem:[%s290 + $0x14] sm:$0xf]
      %v311 = vld [vmem:[%s290 + $0x18] sm:$0xf]
      %v312 = vld [vmem:[%s290 + $0x1c] sm:$0xf]
      %v313 = vld [vmem:[%s290 + $0x20] sm:$0xf]
      %v314 = vld [vmem:[%s290 + $0x24] sm:$0xf]
      %v315 = vld [vmem:[%s290 + $0x28] sm:$0xf]
      %v316 = vld [vmem:[%s290 + $0x2c] sm:$0xf]
      %v317 = vld [vmem:[%s290 + $0x30] sm:$0xf]
      %v318 = vld [vmem:[%s290 + $0x34] sm:$0xf]
      %v319 = vld [vmem:[%s290 + $0x38] sm:$0xf]
      %v320 = vld [vmem:[%s290 + $0x3c] sm:$0xf]
      %v321 = vld [vmem:[%s290 + $0x40] sm:$0xf]
      %v322 = vld [vmem:[%s290 + $0x44] sm:$0xf]
      %v323 = vld [vmem:[%s290 + $0x48] sm:$0xf]
      %v324 = vld [vmem:[%s290 + $0x4c] sm:$0xf]
      %v325 = vld [vmem:[%s290 + $0x50] sm:$0xf]
      %v326 = vld [vmem:[%s290 + $0x54] sm:$0xf]
      %v327 = vld [vmem:[%s290 + $0x58] sm:$0xf]
      %v328 = vld [vmem:[%s290 + $0x5c] sm:$0xf]
      %v329 = vld [vmem:[%s290 + $0x60] sm:$0xf]
      %v330 = vld [vmem:[%s290 + $0x64] sm:$0xf]
      %v331 = vld [vmem:[%s290 + $0x68] sm:$0xf]
      %v332 = vld [vmem:[%s290 + $0x6c] sm:$0xf]
      %v333 = vld [vmem:[%s290 + $0x70] sm:$0xf]
      %v334 = vld [vmem:[%s290 + $0x74] sm:$0xf]
      %v335 = vld [vmem:[%s290 + $0x78] sm:$0xf]
      %v336 = vld [vmem:[%s290 + $0x7c] sm:$0xf]
      %v337 = vld [vmem:[%s2] sm:$0xf]
      %v370 = vunpack.c.l.b16 %v305
      %v371 = vunpack.c.l.b16 %v306
      %v372 = vunpack.c.l.b16 %v307
      %v373 = vunpack.c.l.b16 %v308
      %v374 = vunpack.c.l.b16 %v309
      %v375 = vunpack.c.l.b16 %v310
      %v376 = vunpack.c.l.b16 %v311
      %v377 = vunpack.c.l.b16 %v312
      %v378 = vunpack.c.l.b16 %v313
      %v379 = vunpack.c.l.b16 %v314
      %v380 = vunpack.c.l.b16 %v315
      %v381 = vunpack.c.l.b16 %v316
      %v382 = vunpack.c.l.b16 %v317
      %v383 = vunpack.c.l.b16 %v318
      %v384 = vunpack.c.l.b16 %v319
      %v385 = vunpack.c.l.b16 %v320
      %v386 = vunpack.c.l.b16 %v321
      %v387 = vunpack.c.l.b16 %v322
      %v388 = vunpack.c.l.b16 %v323
      %v389 = vunpack.c.l.b16 %v324
      %v390 = vunpack.c.l.b16 %v325
      %v391 = vunpack.c.l.b16 %v326
      %v392 = vunpack.c.l.b16 %v327
      %v393 = vunpack.c.l.b16 %v328
      %v394 = vunpack.c.l.b16 %v329
      %v395 = vunpack.c.l.b16 %v330
      %v396 = vunpack.c.l.b16 %v331
      %v397 = vunpack.c.l.b16 %v332
      %v398 = vunpack.c.l.b16 %v333
      %v399 = vunpack.c.l.b16 %v334
      %v400 = vunpack.c.l.b16 %v335
      %v401 = vunpack.c.l.b16 %v336
      %v402 = vpack.c.b16 %v371, %v370
      %v403 = vpack.c.b16 %v373, %v372
      %v404 = vpack.c.b16 %v375, %v374
      %v405 = vpack.c.b16 %v377, %v376
      %v406 = vpack.c.b16 %v379, %v378
      %v407 = vpack.c.b16 %v381, %v380
      %v408 = vpack.c.b16 %v383, %v382
      %v409 = vpack.c.b16 %v385, %v384
      %v410 = vpack.c.b16 %v387, %v386
      %v411 = vpack.c.b16 %v389, %v388
      %v412 = vpack.c.b16 %v391, %v390
      %v413 = vpack.c.b16 %v393, %v392
      %v414 = vpack.c.b16 %v395, %v394
      %v415 = vpack.c.b16 %v397, %v396
      %v416 = vpack.c.b16 %v399, %v398
      %v417 = vpack.c.b16 %v401, %v400
      %vm418 = vcmask 64512
      %v420 = vsel %vm418, %v402, 0
      %v423 = vsel %vm418, %v403, 0
      %v426 = vsel %vm418, %v404, 0
      %v429 = vsel %vm418, %v405, 0
      %v432 = vsel %vm418, %v406, 0
      %v435 = vsel %vm418, %v407, 0
      %v438 = vsel %vm418, %v408, 0
      %v441 = vsel %vm418, %v409, 0
      %v444 = vsel %vm418, %v410, 0
      %v447 = vsel %vm418, %v411, 0
      %v450 = vsel %vm418, %v412, 0
      %v453 = vsel %vm418, %v413, 0
      %v456 = vsel %vm418, %v414, 0
      %v459 = vsel %vm418, %v415, 0
      %v462 = vsel %vm418, %v416, 0
      %v465 = vsel %vm418, %v417, 0
      %vm467 = vcmask 1043456
      %v469 = vsel %vm467, %v337, 0
      %471 = vmatprep.subr.bf16.mxu0 0
      %472 = vmatpush1.bf16.msra.mxu0 0
      %473 = vmatprep.subr.bf16.mxu0 0
      %474 = vmatpush1.bf16.msra.mxu0 0
      %475 = vmatprep.subr.bf16.mxu0 0
      %476 = vmatpush1.bf16.msra.mxu0 0
      %477 = vmatprep.subr.bf16.mxu0 0
      %478 = vmatpush1.bf16.msra.mxu0 0
      %479 = vmatprep.subr.bf16.mxu0 0
      %480 = vmatpush1.bf16.msra.mxu0 0
      %481 = vmatprep.subr.bf16.mxu0 0
      %482 = vmatpush1.bf16.msra.mxu0 0
      %483 = vmatprep.subr.bf16.mxu0 0
      %484 = vmatpush1.bf16.msra.mxu0 0
      %485 = vmatprep.subr.bf16.mxu0 0
      %486 = vmatpush1.bf16.msra.mxu0 %v469
      %487 = vmatprep.subr.bf16.mxu0 0
      %488 = vmatpush2.bf16.msra.mxu0 0
      %489 = vmatprep.subr.bf16.mxu0 0
      %490 = vmatpush2.bf16.msra.mxu0 0
      %491 = vmatprep.subr.bf16.mxu0 0
      %492 = vmatpush2.bf16.msra.mxu0 0
      %493 = vmatprep.subr.bf16.mxu0 0
      %494 = vmatpush2.bf16.msra.mxu0 0
      %495 = vmatprep.subr.bf16.mxu0 0
      %496 = vmatpush2.bf16.msra.mxu0 0
      %497 = vmatprep.subr.bf16.mxu0 0
      %498 = vmatpush2.bf16.msra.mxu0 0
      %499 = vmatprep.subr.bf16.mxu0 0
      %500 = vmatpush2.bf16.msra.mxu0 0
      %501 = vmatprep.subr.bf16.mxu0 0
      %502 = vmatpush2.bf16.msra.mxu0 0
      %503 = vmatprep.mubr.bf16.mxu0 0
      %504 = vmatmul.mubr.bf16.gmra.mxu0 %v420
      %v505 = vpop.f32.mrf.mxu0
      %v506 = vadd.f32 0.0, %v505
      %v507 = vpop.f32.mrf.mxu0
      %v508 = vpop.f32.mrf.mxu0
      %v509 = vadd.f32 0.0, %v508
      %v510 = vpop.f32.mrf.mxu0
      %511 = vmatprep.mubr.bf16.mxu0 0
      %512 = vmatmul.mubr.bf16.gmra.mxu0 %v423
      %v513 = vpop.f32.mrf.mxu0
      %v514 = vadd.f32 0.0, %v513
      %v515 = vpop.f32.mrf.mxu0
      %v516 = vpop.f32.mrf.mxu0
      %v517 = vadd.f32 0.0, %v516
      %v518 = vpop.f32.mrf.mxu0
      %519 = vmatprep.mubr.bf16.mxu0 0
      %520 = vmatmul.mubr.bf16.gmra.mxu0 %v426
      %v521 = vpop.f32.mrf.mxu0
      %v522 = vadd.f32 0.0, %v521
      %v523 = vpop.f32.mrf.mxu0
      %v524 = vpop.f32.mrf.mxu0
      %v525 = vadd.f32 0.0, %v524
      %v526 = vpop.f32.mrf.mxu0
      %527 = vmatprep.mubr.bf16.mxu0 0
      %528 = vmatmul.mubr.bf16.gmra.mxu0 %v429
      %v529 = vpop.f32.mrf.mxu0
      %v530 = vadd.f32 0.0, %v529
      %v531 = vpop.f32.mrf.mxu0
      %v532 = vpop.f32.mrf.mxu0
      %v533 = vadd.f32 0.0, %v532
      %v534 = vpop.f32.mrf.mxu0
      %535 = vmatprep.mubr.bf16.mxu0 0
      %536 = vmatmul.mubr.bf16.gmra.mxu0 %v432
      %v537 = vpop.f32.mrf.mxu0
      %v538 = vadd.f32 0.0, %v537
      %v539 = vpop.f32.mrf.mxu0
      %v540 = vpop.f32.mrf.mxu0
      %v541 = vadd.f32 0.0, %v540
      %v542 = vpop.f32.mrf.mxu0
      %543 = vmatprep.mubr.bf16.mxu0 0
      %544 = vmatmul.mubr.bf16.gmra.mxu0 %v435
      %v545 = vpop.f32.mrf.mxu0
      %v546 = vadd.f32 0.0, %v545
      %v547 = vpop.f32.mrf.mxu0
      %v548 = vpop.f32.mrf.mxu0
      %v549 = vadd.f32 0.0, %v548
      %v550 = vpop.f32.mrf.mxu0
      %551 = vmatprep.mubr.bf16.mxu0 0
      %552 = vmatmul.mubr.bf16.gmra.mxu0 %v438
      %v553 = vpop.f32.mrf.mxu0
      %v554 = vadd.f32 0.0, %v553
      %v555 = vpop.f32.mrf.mxu0
      %v556 = vpop.f32.mrf.mxu0
      %v557 = vadd.f32 0.0, %v556
      %v558 = vpop.f32.mrf.mxu0
      %559 = vmatprep.mubr.bf16.mxu0 0
      %560 = vmatmul.mubr.bf16.gmra.mxu0 %v441
      %v561 = vpop.f32.mrf.mxu0
      %v562 = vadd.f32 0.0, %v561
      %v563 = vpop.f32.mrf.mxu0
      %v564 = vpop.f32.mrf.mxu0
      %v565 = vadd.f32 0.0, %v564
      %v566 = vpop.f32.mrf.mxu0
      %567 = vmatprep.mubr.bf16.mxu0 0
      %568 = vmatmul.mubr.bf16.gmra.mxu0 %v444
      %v569 = vpop.f32.mrf.mxu0
      %v570 = vadd.f32 0.0, %v569
      %v571 = vpop.f32.mrf.mxu0
      %v572 = vpop.f32.mrf.mxu0
      %v573 = vadd.f32 0.0, %v572
      %v574 = vpop.f32.mrf.mxu0
      %575 = vmatprep.mubr.bf16.mxu0 0
      %576 = vmatmul.mubr.bf16.gmra.mxu0 %v447
      %v577 = vpop.f32.mrf.mxu0
      %v578 = vadd.f32 0.0, %v577
      %v579 = vpop.f32.mrf.mxu0
      %v580 = vpop.f32.mrf.mxu0
      %v581 = vadd.f32 0.0, %v580
      %v582 = vpop.f32.mrf.mxu0
      %583 = vmatprep.mubr.bf16.mxu0 0
      %584 = vmatmul.mubr.bf16.gmra.mxu0 %v450
      %v585 = vpop.f32.mrf.mxu0
      %v586 = vadd.f32 0.0, %v585
      %v587 = vpop.f32.mrf.mxu0
      %v588 = vpop.f32.mrf.mxu0
      %v589 = vadd.f32 0.0, %v588
      %v590 = vpop.f32.mrf.mxu0
      %591 = vmatprep.mubr.bf16.mxu0 0
      %592 = vmatmul.mubr.bf16.gmra.mxu0 %v453
      %v593 = vpop.f32.mrf.mxu0
      %v594 = vadd.f32 0.0, %v593
      %v595 = vpop.f32.mrf.mxu0
      %v596 = vpop.f32.mrf.mxu0
      %v597 = vadd.f32 0.0, %v596
      %v598 = vpop.f32.mrf.mxu0
      %599 = vmatprep.mubr.bf16.mxu0 0
      %600 = vmatmul.mubr.bf16.gmra.mxu0 %v456
      %v601 = vpop.f32.mrf.mxu0
      %v602 = vadd.f32 0.0, %v601
      %v603 = vpop.f32.mrf.mxu0
      %v604 = vpop.f32.mrf.mxu0
      %v605 = vadd.f32 0.0, %v604
      %v606 = vpop.f32.mrf.mxu0
      %607 = vmatprep.mubr.bf16.mxu0 0
      %608 = vmatmul.mubr.bf16.gmra.mxu0 %v459
      %v609 = vpop.f32.mrf.mxu0
      %v610 = vadd.f32 0.0, %v609
      %v611 = vpop.f32.mrf.mxu0
      %v612 = vpop.f32.mrf.mxu0
      %v613 = vadd.f32 0.0, %v612
      %v614 = vpop.f32.mrf.mxu0
      %615 = vmatprep.mubr.bf16.mxu0 0
      %616 = vmatmul.mubr.bf16.gmra.mxu0 %v462
      %v617 = vpop.f32.mrf.mxu0
      %v618 = vadd.f32 0.0, %v617
      %v619 = vpop.f32.mrf.mxu0
      %v620 = vpop.f32.mrf.mxu0
      %v621 = vadd.f32 0.0, %v620
      %v622 = vpop.f32.mrf.mxu0
      %623 = vmatprep.mubr.bf16.mxu0 0
      %624 = vmatmul.mubr.bf16.gmra.mxu0 %v465
      %v625 = vpop.f32.mrf.mxu0
      %v626 = vadd.f32 0.0, %v625
      %v627 = vpop.f32.mrf.mxu0
      %v628 = vpop.f32.mrf.mxu0
      %v629 = vadd.f32 0.0, %v628
      %v630 = vpop.f32.mrf.mxu0
      %631 = vdwg.mxu0
      %v632 = vld [vmem:[%s3] sm:$0x1]
      %v634 = vlaneseq
      %v635 = vshrl.u32 %v634, 7
      %v636 = vsub.s32 0, %v635
      %v637 = vrot.slane %v632, %v636
      %v639 = vmul.f32 %v506, %v637
      %v640 = vmul.f32 %v509, %v637
      %v641 = vmul.f32 %v514, %v637
      %v642 = vmul.f32 %v517, %v637
      %v643 = vmul.f32 %v522, %v637
      %v644 = vmul.f32 %v525, %v637
      %v645 = vmul.f32 %v530, %v637
      %v646 = vmul.f32 %v533, %v637
      %v647 = vmul.f32 %v538, %v637
      %v648 = vmul.f32 %v541, %v637
      %v649 = vmul.f32 %v546, %v637
      %v650 = vmul.f32 %v549, %v637
      %v651 = vmul.f32 %v554, %v637
      %v652 = vmul.f32 %v557, %v637
      %v653 = vmul.f32 %v562, %v637
      %v654 = vmul.f32 %v565, %v637
      %v655 = vmul.f32 %v570, %v637
      %v656 = vmul.f32 %v573, %v637
      %v657 = vmul.f32 %v578, %v637
      %v658 = vmul.f32 %v581, %v637
      %v659 = vmul.f32 %v586, %v637
      %v660 = vmul.f32 %v589, %v637
      %v661 = vmul.f32 %v594, %v637
      %v662 = vmul.f32 %v597, %v637
      %v663 = vmul.f32 %v602, %v637
      %v664 = vmul.f32 %v605, %v637
      %v665 = vmul.f32 %v610, %v637
      %v666 = vmul.f32 %v613, %v637
      %v667 = vmul.f32 %v618, %v637
      %v668 = vmul.f32 %v621, %v637
      %v669 = vmul.f32 %v626, %v637
      %v670 = vmul.f32 %v629, %v637
      %v671 = vld [vmem:[%s4] sm:$0x1]
      %v673 = vlaneseq
      %v674 = vshrl.u32 %v673, 7
      %v675 = vsub.s32 0, %v674
      %v676 = vrot.slane %v671, %v675
      %v678 = vadd.f32 %v639, %v676
      %v679 = vadd.f32 %v640, %v676
      %v680 = vadd.f32 %v641, %v676
      %v681 = vadd.f32 %v642, %v676
      %v682 = vadd.f32 %v643, %v676
      %v683 = vadd.f32 %v644, %v676
      %v684 = vadd.f32 %v645, %v676
      %v685 = vadd.f32 %v646, %v676
      %v686 = vadd.f32 %v647, %v676
      %v687 = vadd.f32 %v648, %v676
      %v688 = vadd.f32 %v649, %v676
      %v689 = vadd.f32 %v650, %v676
      %v690 = vadd.f32 %v651, %v676
      %v691 = vadd.f32 %v652, %v676
      %v692 = vadd.f32 %v653, %v676
      %v693 = vadd.f32 %v654, %v676
      %v694 = vadd.f32 %v655, %v676
      %v695 = vadd.f32 %v656, %v676
      %v696 = vadd.f32 %v657, %v676
      %v697 = vadd.f32 %v658, %v676
      %v698 = vadd.f32 %v659, %v676
      %v699 = vadd.f32 %v660, %v676
      %v700 = vadd.f32 %v661, %v676
      %v701 = vadd.f32 %v662, %v676
      %v702 = vadd.f32 %v663, %v676
      %v703 = vadd.f32 %v664, %v676
      %v704 = vadd.f32 %v665, %v676
      %v705 = vadd.f32 %v666, %v676
      %v706 = vadd.f32 %v667, %v676
      %v707 = vadd.f32 %v668, %v676
      %v708 = vadd.f32 %v669, %v676
      %v709 = vadd.f32 %v670, %v676
      %v710 = vld [vmem:[%s296] sm:$0xf]
      %v711 = vld [vmem:[%s296 + $0x4] sm:$0xf]
      %v712 = vld [vmem:[%s296 + $0x8] sm:$0xf]
      %v713 = vld [vmem:[%s296 + $0xc] sm:$0xf]
      %v714 = vld [vmem:[%s296 + $0x10] sm:$0xf]
      %v715 = vld [vmem:[%s296 + $0x14] sm:$0xf]
      %v716 = vld [vmem:[%s296 + $0x18] sm:$0xf]
      %v717 = vld [vmem:[%s296 + $0x1c] sm:$0xf]
      %v718 = vld [vmem:[%s296 + $0x20] sm:$0xf]
      %v719 = vld [vmem:[%s296 + $0x24] sm:$0xf]
      %v720 = vld [vmem:[%s296 + $0x28] sm:$0xf]
      %v721 = vld [vmem:[%s296 + $0x2c] sm:$0xf]
      %v722 = vld [vmem:[%s296 + $0x30] sm:$0xf]
      %v723 = vld [vmem:[%s296 + $0x34] sm:$0xf]
      %v724 = vld [vmem:[%s296 + $0x38] sm:$0xf]
      %v725 = vld [vmem:[%s296 + $0x3c] sm:$0xf]
      %v726 = vld [vmem:[%s296 + $0x40] sm:$0xf]
      %v727 = vld [vmem:[%s296 + $0x44] sm:$0xf]
      %v728 = vld [vmem:[%s296 + $0x48] sm:$0xf]
      %v729 = vld [vmem:[%s296 + $0x4c] sm:$0xf]
      %v730 = vld [vmem:[%s296 + $0x50] sm:$0xf]
      %v731 = vld [vmem:[%s296 + $0x54] sm:$0xf]
      %v732 = vld [vmem:[%s296 + $0x58] sm:$0xf]
      %v733 = vld [vmem:[%s296 + $0x5c] sm:$0xf]
      %v734 = vld [vmem:[%s296 + $0x60] sm:$0xf]
      %v735 = vld [vmem:[%s296 + $0x64] sm:$0xf]
      %v736 = vld [vmem:[%s296 + $0x68] sm:$0xf]
      %v737 = vld [vmem:[%s296 + $0x6c] sm:$0xf]
      %v738 = vld [vmem:[%s296 + $0x70] sm:$0xf]
      %v739 = vld [vmem:[%s296 + $0x74] sm:$0xf]
      %v740 = vld [vmem:[%s296 + $0x78] sm:$0xf]
      %v741 = vld [vmem:[%s296 + $0x7c] sm:$0xf]
      %v742 = vunpack.c.l.bf16 %v710
      %v743 = vunpack.c.l.bf16 %v711
      %v744 = vunpack.c.l.bf16 %v712
      %v745 = vunpack.c.l.bf16 %v713
      %v746 = vunpack.c.l.bf16 %v714
      %v747 = vunpack.c.l.bf16 %v715
      %v748 = vunpack.c.l.bf16 %v716
      %v749 = vunpack.c.l.bf16 %v717
      %v750 = vunpack.c.l.bf16 %v718
      %v751 = vunpack.c.l.bf16 %v719
      %v752 = vunpack.c.l.bf16 %v720
      %v753 = vunpack.c.l.bf16 %v721
      %v754 = vunpack.c.l.bf16 %v722
      %v755 = vunpack.c.l.bf16 %v723
      %v756 = vunpack.c.l.bf16 %v724
      %v757 = vunpack.c.l.bf16 %v725
      %v758 = vunpack.c.l.bf16 %v726
      %v759 = vunpack.c.l.bf16 %v727
      %v760 = vunpack.c.l.bf16 %v728
      %v761 = vunpack.c.l.bf16 %v729
      %v762 = vunpack.c.l.bf16 %v730
      %v763 = vunpack.c.l.bf16 %v731
      %v764 = vunpack.c.l.bf16 %v732
      %v765 = vunpack.c.l.bf16 %v733
      %v766 = vunpack.c.l.bf16 %v734
      %v767 = vunpack.c.l.bf16 %v735
      %v768 = vunpack.c.l.bf16 %v736
      %v769 = vunpack.c.l.bf16 %v737
      %v770 = vunpack.c.l.bf16 %v738
      %v771 = vunpack.c.l.bf16 %v739
      %v772 = vunpack.c.l.bf16 %v740
      %v773 = vunpack.c.l.bf16 %v741
      %806 = vrot.lane.b32.xlu0 %v742, 8
      %v807 = vpop.permute.xlu0 %806
      %808 = vrot.lane.b32.xlu0 %v743, 8
      %v809 = vpop.permute.xlu0 %808
      %810 = vrot.lane.b32.xlu0 %v744, 8
      %v811 = vpop.permute.xlu0 %810
      %812 = vrot.lane.b32.xlu0 %v745, 8
      %v813 = vpop.permute.xlu0 %812
      %814 = vrot.lane.b32.xlu0 %v746, 8
      %v815 = vpop.permute.xlu0 %814
      %816 = vrot.lane.b32.xlu0 %v747, 8
      %v817 = vpop.permute.xlu0 %816
      %818 = vrot.lane.b32.xlu0 %v748, 8
      %v819 = vpop.permute.xlu0 %818
      %820 = vrot.lane.b32.xlu0 %v749, 8
      %v821 = vpop.permute.xlu0 %820
      %822 = vrot.lane.b32.xlu0 %v750, 8
      %v823 = vpop.permute.xlu0 %822
      %824 = vrot.lane.b32.xlu0 %v751, 8
      %v825 = vpop.permute.xlu0 %824
      %826 = vrot.lane.b32.xlu0 %v752, 8
      %v827 = vpop.permute.xlu0 %826
      %828 = vrot.lane.b32.xlu0 %v753, 8
      %v829 = vpop.permute.xlu0 %828
      %830 = vrot.lane.b32.xlu0 %v754, 8
      %v831 = vpop.permute.xlu0 %830
      %832 = vrot.lane.b32.xlu0 %v755, 8
      %v833 = vpop.permute.xlu0 %832
      %834 = vrot.lane.b32.xlu0 %v756, 8
      %v835 = vpop.permute.xlu0 %834
      %836 = vrot.lane.b32.xlu0 %v757, 8
      %v837 = vpop.permute.xlu0 %836
      %838 = vrot.lane.b32.xlu0 %v758, 8
      %v839 = vpop.permute.xlu0 %838
      %840 = vrot.lane.b32.xlu0 %v759, 8
      %v841 = vpop.permute.xlu0 %840
      %842 = vrot.lane.b32.xlu0 %v760, 8
      %v843 = vpop.permute.xlu0 %842
      %844 = vrot.lane.b32.xlu0 %v761, 8
      %v845 = vpop.permute.xlu0 %844
      %846 = vrot.lane.b32.xlu0 %v762, 8
      %v847 = vpop.permute.xlu0 %846
      %848 = vrot.lane.b32.xlu0 %v763, 8
      %v849 = vpop.permute.xlu0 %848
      %850 = vrot.lane.b32.xlu0 %v764, 8
      %v851 = vpop.permute.xlu0 %850
      %852 = vrot.lane.b32.xlu0 %v765, 8
      %v853 = vpop.permute.xlu0 %852
      %854 = vrot.lane.b32.xlu0 %v766, 8
      %v855 = vpop.permute.xlu0 %854
      %856 = vrot.lane.b32.xlu0 %v767, 8
      %v857 = vpop.permute.xlu0 %856
      %858 = vrot.lane.b32.xlu0 %v768, 8
      %v859 = vpop.permute.xlu0 %858
      %860 = vrot.lane.b32.xlu0 %v769, 8
      %v861 = vpop.permute.xlu0 %860
      %862 = vrot.lane.b32.xlu0 %v770, 8
      %v863 = vpop.permute.xlu0 %862
      %864 = vrot.lane.b32.xlu0 %v771, 8
      %v865 = vpop.permute.xlu0 %864
      %866 = vrot.lane.b32.xlu0 %v772, 8
      %v867 = vpop.permute.xlu0 %866
      %868 = vrot.lane.b32.xlu0 %v773, 8
      %v869 = vpop.permute.xlu0 %868
      %v902 = vsel %vm418, %v678, %v807
      %v903 = vsel %vm418, %v679, %v809
      %v904 = vsel %vm418, %v680, %v811
      %v905 = vsel %vm418, %v681, %v813
      %v906 = vsel %vm418, %v682, %v815
      %v907 = vsel %vm418, %v683, %v817
      %v908 = vsel %vm418, %v684, %v819
      %v909 = vsel %vm418, %v685, %v821
      %v910 = vsel %vm418, %v686, %v823
      %v911 = vsel %vm418, %v687, %v825
      %v912 = vsel %vm418, %v688, %v827
      %v913 = vsel %vm418, %v689, %v829
      %v914 = vsel %vm418, %v690, %v831
      %v915 = vsel %vm418, %v691, %v833
      %v916 = vsel %vm418, %v692, %v835
      %v917 = vsel %vm418, %v693, %v837
      %v918 = vsel %vm418, %v694, %v839
      %v919 = vsel %vm418, %v695, %v841
      %v920 = vsel %vm418, %v696, %v843
      %v921 = vsel %vm418, %v697, %v845
      %v922 = vsel %vm418, %v698, %v847
      %v923 = vsel %vm418, %v699, %v849
      %v924 = vsel %vm418, %v700, %v851
      %v925 = vsel %vm418, %v701, %v853
      %v926 = vsel %vm418, %v702, %v855
      %v927 = vsel %vm418, %v703, %v857
      %v928 = vsel %vm418, %v704, %v859
      %v929 = vsel %vm418, %v705, %v861
      %v930 = vsel %vm418, %v706, %v863
      %v931 = vsel %vm418, %v707, %v865
      %v932 = vsel %vm418, %v708, %v867
      %v933 = vsel %vm418, %v709, %v869
      %v934 = vld [vmem:[%s5] sm:$0xff]
      %v935 = vld [vmem:[%s5 + $0x8] sm:$0xff]
      %v936 = vld [vmem:[%s6] sm:$0x1]
      %v938 = vlaneseq
      %v939 = vshrl.u32 %v938, 7
      %v940 = vsub.s32 0, %v939
      %v941 = vrot.slane %v936, %v940
      %vm943 = vcmask 130048
      %v945 = vsel %vm943, %v902, 0
      %v948 = vsel %vm943, %v903, 0
      %v951 = vsel %vm943, %v904, 0
      %v954 = vsel %vm943, %v905, 0
      %v957 = vsel %vm943, %v906, 0
      %v960 = vsel %vm943, %v907, 0
      %v963 = vsel %vm943, %v908, 0
      %v966 = vsel %vm943, %v909, 0
      %v969 = vsel %vm943, %v910, 0
      %v972 = vsel %vm943, %v911, 0
      %v975 = vsel %vm943, %v912, 0
      %v978 = vsel %vm943, %v913, 0
      %v981 = vsel %vm943, %v914, 0
      %v984 = vsel %vm943, %v915, 0
      %v987 = vsel %vm943, %v916, 0
      %v990 = vsel %vm943, %v917, 0
      %v993 = vsel %vm943, %v918, 0
      %v996 = vsel %vm943, %v919, 0
      %v999 = vsel %vm943, %v920, 0
      %v1002 = vsel %vm943, %v921, 0
      %v1005 = vsel %vm943, %v922, 0
      %v1008 = vsel %vm943, %v923, 0
      %v1011 = vsel %vm943, %v924, 0
      %v1014 = vsel %vm943, %v925, 0
      %v1017 = vsel %vm943, %v926, 0
      %v1020 = vsel %vm943, %v927, 0
      %v1023 = vsel %vm943, %v928, 0
      %v1026 = vsel %vm943, %v929, 0
      %v1029 = vsel %vm943, %v930, 0
      %v1032 = vsel %vm943, %v931, 0
      %v1035 = vsel %vm943, %v932, 0
      %v1038 = vsel %vm943, %v933, 0
      %1040 = vmatprep.subr.mxu0 0.0
      %1041 = vmatpush1.msra.mxu0 0.0
      %1042 = vmatprep.subr.mxu0 0.0
      %1043 = vmatpush1.msra.mxu0 0.0
      %1044 = vmatprep.subr.mxu0 0.0
      %1045 = vmatpush1.msra.mxu0 0.0
      %1046 = vmatprep.subr.mxu0 0.0
      %1047 = vmatpush1.msra.mxu0 0.0
      %1048 = vmatprep.subr.mxu0 0.0
      %1049 = vmatpush1.msra.mxu0 0.0
      %1050 = vmatprep.subr.mxu0 0.0
      %1051 = vmatpush1.msra.mxu0 0.0
      %1052 = vmatprep.subr.mxu0 0.0
      %1053 = vmatpush1.msra.mxu0 0.0
      %1054 = vmatprep.subr.mxu0 0.0
      %1055 = vmatpush1.msra.mxu0 0.0
      %1056 = vmatprep.subr.mxu0 0.0
      %1057 = vmatpush1.msra.mxu0 0.0
      %1058 = vmatprep.subr.mxu0 0.0
      %1059 = vmatpush1.msra.mxu0 0.0
      %1060 = vmatprep.subr.mxu0 0.0
      %1061 = vmatpush1.msra.mxu0 0.0
      %1062 = vmatprep.subr.mxu0 0.0
      %1063 = vmatpush1.msra.mxu0 0.0
      %1064 = vmatprep.subr.mxu0 0.0
      %1065 = vmatpush1.msra.mxu0 0.0
      %1066 = vmatprep.subr.mxu0 0.0
      %1067 = vmatpush1.msra.mxu0 0.0
      %1068 = vmatprep.subr.mxu0 0.0
      %1069 = vmatpush1.msra.mxu0 %v935
      %1070 = vmatprep.subr.mxu0 0.0
      %1071 = vmatpush1.msra.mxu0 %v934
      %1072 = vmatprep.subr.mxu0 0.0
      %1073 = vmatpush2.msra.mxu0 0.0
      %1074 = vmatprep.subr.mxu0 0.0
      %1075 = vmatpush2.msra.mxu0 0.0
      %1076 = vmatprep.subr.mxu0 0.0
      %1077 = vmatpush2.msra.mxu0 0.0
      %1078 = vmatprep.subr.mxu0 0.0
      %1079 = vmatpush2.msra.mxu0 0.0
      %1080 = vmatprep.subr.mxu0 0.0
      %1081 = vmatpush2.msra.mxu0 0.0
      %1082 = vmatprep.subr.mxu0 0.0
      %1083 = vmatpush2.msra.mxu0 0.0
      %1084 = vmatprep.subr.mxu0 0.0
      %1085 = vmatpush2.msra.mxu0 0.0
      %1086 = vmatprep.subr.mxu0 0.0
      %1087 = vmatpush2.msra.mxu0 0.0
      %1088 = vmatprep.subr.mxu0 0.0
      %1089 = vmatpush2.msra.mxu0 0.0
      %1090 = vmatprep.subr.mxu0 0.0
      %1091 = vmatpush2.msra.mxu0 0.0
      %1092 = vmatprep.subr.mxu0 0.0
      %1093 = vmatpush2.msra.mxu0 0.0
      %1094 = vmatprep.subr.mxu0 0.0
      %1095 = vmatpush2.msra.mxu0 0.0
      %1096 = vmatprep.subr.mxu0 0.0
      %1097 = vmatpush2.msra.mxu0 0.0
      %1098 = vmatprep.subr.mxu0 0.0
      %1099 = vmatpush2.msra.mxu0 0.0
      %1100 = vmatprep.subr.mxu0 0.0
      %1101 = vmatpush2.msra.mxu0 0.0
      %1102 = vmatprep.subr.mxu0 0.0
      %1103 = vmatpush2.msra.mxu0 0.0
      %1104 = vmatprep.mubr.f32.mxu0 0.0
      %1105 = vmatmul.mubr.f32.gmra.mxu0 %v945
      %v1106 = vpop.f32.mrf.mxu0
      %v1107 = vadd.f32 %v941, %v1106
      %v1108 = vpop.f32.mrf.mxu0
      %1109 = vmatprep.mubr.f32.mxu0 0.0
      %1110 = vmatmul.mubr.f32.gmra.mxu0 %v948
      %v1111 = vpop.f32.mrf.mxu0
      %v1112 = vadd.f32 %v941, %v1111
      %v1113 = vpop.f32.mrf.mxu0
      %1114 = vmatprep.mubr.f32.mxu0 0.0
      %1115 = vmatmul.mubr.f32.gmra.mxu0 %v951
      %v1116 = vpop.f32.mrf.mxu0
      %v1117 = vadd.f32 %v941, %v1116
      %v1118 = vpop.f32.mrf.mxu0
      %1119 = vmatprep.mubr.f32.mxu0 0.0
      %1120 = vmatmul.mubr.f32.gmra.mxu0 %v954
      %v1121 = vpop.f32.mrf.mxu0
      %v1122 = vadd.f32 %v941, %v1121
      %v1123 = vpop.f32.mrf.mxu0
      %1124 = vmatprep.mubr.f32.mxu0 0.0
      %1125 = vmatmul.mubr.f32.gmra.mxu0 %v957
      %v1126 = vpop.f32.mrf.mxu0
      %v1127 = vadd.f32 %v941, %v1126
      %v1128 = vpop.f32.mrf.mxu0
      %1129 = vmatprep.mubr.f32.mxu0 0.0
      %1130 = vmatmul.mubr.f32.gmra.mxu0 %v960
      %v1131 = vpop.f32.mrf.mxu0
      %v1132 = vadd.f32 %v941, %v1131
      %v1133 = vpop.f32.mrf.mxu0
      %1134 = vmatprep.mubr.f32.mxu0 0.0
      %1135 = vmatmul.mubr.f32.gmra.mxu0 %v963
      %v1136 = vpop.f32.mrf.mxu0
      %v1137 = vadd.f32 %v941, %v1136
      %v1138 = vpop.f32.mrf.mxu0
      %1139 = vmatprep.mubr.f32.mxu0 0.0
      %1140 = vmatmul.mubr.f32.gmra.mxu0 %v966
      %v1141 = vpop.f32.mrf.mxu0
      %v1142 = vadd.f32 %v941, %v1141
      %v1143 = vpop.f32.mrf.mxu0
      %1144 = vmatprep.mubr.f32.mxu0 0.0
      %1145 = vmatmul.mubr.f32.gmra.mxu0 %v969
      %v1146 = vpop.f32.mrf.mxu0
      %v1147 = vadd.f32 %v941, %v1146
      %v1148 = vpop.f32.mrf.mxu0
      %1149 = vmatprep.mubr.f32.mxu0 0.0
      %1150 = vmatmul.mubr.f32.gmra.mxu0 %v972
      %v1151 = vpop.f32.mrf.mxu0
      %v1152 = vadd.f32 %v941, %v1151
      %v1153 = vpop.f32.mrf.mxu0
      %1154 = vmatprep.mubr.f32.mxu0 0.0
      %1155 = vmatmul.mubr.f32.gmra.mxu0 %v975
      %v1156 = vpop.f32.mrf.mxu0
      %v1157 = vadd.f32 %v941, %v1156
      %v1158 = vpop.f32.mrf.mxu0
      %1159 = vmatprep.mubr.f32.mxu0 0.0
      %1160 = vmatmul.mubr.f32.gmra.mxu0 %v978
      %v1161 = vpop.f32.mrf.mxu0
      %v1162 = vadd.f32 %v941, %v1161
      %v1163 = vpop.f32.mrf.mxu0
      %1164 = vmatprep.mubr.f32.mxu0 0.0
      %1165 = vmatmul.mubr.f32.gmra.mxu0 %v981
      %v1166 = vpop.f32.mrf.mxu0
      %v1167 = vadd.f32 %v941, %v1166
      %v1168 = vpop.f32.mrf.mxu0
      %1169 = vmatprep.mubr.f32.mxu0 0.0
      %1170 = vmatmul.mubr.f32.gmra.mxu0 %v984
      %v1171 = vpop.f32.mrf.mxu0
      %v1172 = vadd.f32 %v941, %v1171
      %v1173 = vpop.f32.mrf.mxu0
      %1174 = vmatprep.mubr.f32.mxu0 0.0
      %1175 = vmatmul.mubr.f32.gmra.mxu0 %v987
      %v1176 = vpop.f32.mrf.mxu0
      %v1177 = vadd.f32 %v941, %v1176
      %v1178 = vpop.f32.mrf.mxu0
      %1179 = vmatprep.mubr.f32.mxu0 0.0
      %1180 = vmatmul.mubr.f32.gmra.mxu0 %v990
      %v1181 = vpop.f32.mrf.mxu0
      %v1182 = vadd.f32 %v941, %v1181
      %v1183 = vpop.f32.mrf.mxu0
      %1184 = vmatprep.mubr.f32.mxu0 0.0
      %1185 = vmatmul.mubr.f32.gmra.mxu0 %v993
      %v1186 = vpop.f32.mrf.mxu0
      %v1187 = vadd.f32 %v941, %v1186
      %v1188 = vpop.f32.mrf.mxu0
      %1189 = vmatprep.mubr.f32.mxu0 0.0
      %1190 = vmatmul.mubr.f32.gmra.mxu0 %v996
      %v1191 = vpop.f32.mrf.mxu0
      %v1192 = vadd.f32 %v941, %v1191
      %v1193 = vpop.f32.mrf.mxu0
      %1194 = vmatprep.mubr.f32.mxu0 0.0
      %1195 = vmatmul.mubr.f32.gmra.mxu0 %v999
      %v1196 = vpop.f32.mrf.mxu0
      %v1197 = vadd.f32 %v941, %v1196
      %v1198 = vpop.f32.mrf.mxu0
      %1199 = vmatprep.mubr.f32.mxu0 0.0
      %1200 = vmatmul.mubr.f32.gmra.mxu0 %v1002
      %v1201 = vpop.f32.mrf.mxu0
      %v1202 = vadd.f32 %v941, %v1201
      %v1203 = vpop.f32.mrf.mxu0
      %1204 = vmatprep.mubr.f32.mxu0 0.0
      %1205 = vmatmul.mubr.f32.gmra.mxu0 %v1005
      %v1206 = vpop.f32.mrf.mxu0
      %v1207 = vadd.f32 %v941, %v1206
      %v1208 = vpop.f32.mrf.mxu0
      %1209 = vmatprep.mubr.f32.mxu0 0.0
      %1210 = vmatmul.mubr.f32.gmra.mxu0 %v1008
      %v1211 = vpop.f32.mrf.mxu0
      %v1212 = vadd.f32 %v941, %v1211
      %v1213 = vpop.f32.mrf.mxu0
      %1214 = vmatprep.mubr.f32.mxu0 0.0
      %1215 = vmatmul.mubr.f32.gmra.mxu0 %v1011
      %v1216 = vpop.f32.mrf.mxu0
      %v1217 = vadd.f32 %v941, %v1216
      %v1218 = vpop.f32.mrf.mxu0
      %1219 = vmatprep.mubr.f32.mxu0 0.0
      %1220 = vmatmul.mubr.f32.gmra.mxu0 %v1014
      %v1221 = vpop.f32.mrf.mxu0
      %v1222 = vadd.f32 %v941, %v1221
      %v1223 = vpop.f32.mrf.mxu0
      %1224 = vmatprep.mubr.f32.mxu0 0.0
      %1225 = vmatmul.mubr.f32.gmra.mxu0 %v1017
      %v1226 = vpop.f32.mrf.mxu0
      %v1227 = vadd.f32 %v941, %v1226
      %v1228 = vpop.f32.mrf.mxu0
      %1229 = vmatprep.mubr.f32.mxu0 0.0
      %1230 = vmatmul.mubr.f32.gmra.mxu0 %v1020
      %v1231 = vpop.f32.mrf.mxu0
      %v1232 = vadd.f32 %v941, %v1231
      %v1233 = vpop.f32.mrf.mxu0
      %1234 = vmatprep.mubr.f32.mxu0 0.0
      %1235 = vmatmul.mubr.f32.gmra.mxu0 %v1023
      %v1236 = vpop.f32.mrf.mxu0
      %v1237 = vadd.f32 %v941, %v1236
      %v1238 = vpop.f32.mrf.mxu0
      %1239 = vmatprep.mubr.f32.mxu0 0.0
      %1240 = vmatmul.mubr.f32.gmra.mxu0 %v1026
      %v1241 = vpop.f32.mrf.mxu0
      %v1242 = vadd.f32 %v941, %v1241
      %v1243 = vpop.f32.mrf.mxu0
      %1244 = vmatprep.mubr.f32.mxu0 0.0
      %1245 = vmatmul.mubr.f32.gmra.mxu0 %v1029
      %v1246 = vpop.f32.mrf.mxu0
      %v1247 = vadd.f32 %v941, %v1246
      %v1248 = vpop.f32.mrf.mxu0
      %1249 = vmatprep.mubr.f32.mxu0 0.0
      %1250 = vmatmul.mubr.f32.gmra.mxu0 %v1032
      %v1251 = vpop.f32.mrf.mxu0
      %v1252 = vadd.f32 %v941, %v1251
      %v1253 = vpop.f32.mrf.mxu0
      %1254 = vmatprep.mubr.f32.mxu0 0.0
      %1255 = vmatmul.mubr.f32.gmra.mxu0 %v1035
      %v1256 = vpop.f32.mrf.mxu0
      %v1257 = vadd.f32 %v941, %v1256
      %v1258 = vpop.f32.mrf.mxu0
      %1259 = vmatprep.mubr.f32.mxu0 0.0
      %1260 = vmatmul.mubr.f32.gmra.mxu0 %v1038
      %v1261 = vpop.f32.mrf.mxu0
      %v1262 = vadd.f32 %v941, %v1261
      %v1263 = vpop.f32.mrf.mxu0
      %1264 = vdwg.mxu0
      %v1265 = vxor.u32 %v1107, 2147483648
      %v1266 = vxor.u32 %v1112, 2147483648
      %v1267 = vxor.u32 %v1117, 2147483648
      %v1268 = vxor.u32 %v1122, 2147483648
      %v1269 = vxor.u32 %v1127, 2147483648
      %v1270 = vxor.u32 %v1132, 2147483648
      %v1271 = vxor.u32 %v1137, 2147483648
      %v1272 = vxor.u32 %v1142, 2147483648
      %v1273 = vxor.u32 %v1147, 2147483648
      %v1274 = vxor.u32 %v1152, 2147483648
      %v1275 = vxor.u32 %v1157, 2147483648
      %v1276 = vxor.u32 %v1162, 2147483648
      %v1277 = vxor.u32 %v1167, 2147483648
      %v1278 = vxor.u32 %v1172, 2147483648
      %v1279 = vxor.u32 %v1177, 2147483648
      %v1280 = vxor.u32 %v1182, 2147483648
      %v1281 = vxor.u32 %v1187, 2147483648
      %v1282 = vxor.u32 %v1192, 2147483648
      %v1283 = vxor.u32 %v1197, 2147483648
      %v1284 = vxor.u32 %v1202, 2147483648
      %v1285 = vxor.u32 %v1207, 2147483648
      %v1286 = vxor.u32 %v1212, 2147483648
      %v1287 = vxor.u32 %v1217, 2147483648
      %v1288 = vxor.u32 %v1222, 2147483648
      %v1289 = vxor.u32 %v1227, 2147483648
      %v1290 = vxor.u32 %v1232, 2147483648
      %v1291 = vxor.u32 %v1237, 2147483648
      %v1292 = vxor.u32 %v1242, 2147483648
      %v1293 = vxor.u32 %v1247, 2147483648
      %v1294 = vxor.u32 %v1252, 2147483648
      %v1295 = vxor.u32 %v1257, 2147483648
      %v1296 = vxor.u32 %v1262, 2147483648
      %v1297 = vmul.f32 %v1265, 1.442695
      %v1298 = vpow.pop %v1297
      %v1299 = vmul.f32 %v1266, 1.442695
      %v1300 = vpow.pop %v1299
      %v1301 = vmul.f32 %v1267, 1.442695
      %v1302 = vpow.pop %v1301
      %v1303 = vmul.f32 %v1268, 1.442695
      %v1304 = vpow.pop %v1303
      %v1305 = vmul.f32 %v1269, 1.442695
      %v1306 = vpow.pop %v1305
      %v1307 = vmul.f32 %v1270, 1.442695
      %v1308 = vpow.pop %v1307
      %v1309 = vmul.f32 %v1271, 1.442695
      %v1310 = vpow.pop %v1309
      %v1311 = vmul.f32 %v1272, 1.442695
      %v1312 = vpow.pop %v1311
      %v1313 = vmul.f32 %v1273, 1.442695
      %v1314 = vpow.pop %v1313
      %v1315 = vmul.f32 %v1274, 1.442695
      %v1316 = vpow.pop %v1315
      %v1317 = vmul.f32 %v1275, 1.442695
      %v1318 = vpow.pop %v1317
      %v1319 = vmul.f32 %v1276, 1.442695
      %v1320 = vpow.pop %v1319
      %v1321 = vmul.f32 %v1277, 1.442695
      %v1322 = vpow.pop %v1321
      %v1323 = vmul.f32 %v1278, 1.442695
      %v1324 = vpow.pop %v1323
      %v1325 = vmul.f32 %v1279, 1.442695
      %v1326 = vpow.pop %v1325
      %v1327 = vmul.f32 %v1280, 1.442695
      %v1328 = vpow.pop %v1327
      %v1329 = vmul.f32 %v1281, 1.442695
      %v1330 = vpow.pop %v1329
      %v1331 = vmul.f32 %v1282, 1.442695
      %v1332 = vpow.pop %v1331
      %v1333 = vmul.f32 %v1283, 1.442695
      %v1334 = vpow.pop %v1333
      %v1335 = vmul.f32 %v1284, 1.442695
      %v1336 = vpow.pop %v1335
      %v1337 = vmul.f32 %v1285, 1.442695
      %v1338 = vpow.pop %v1337
      %v1339 = vmul.f32 %v1286, 1.442695
      %v1340 = vpow.pop %v1339
      %v1341 = vmul.f32 %v1287, 1.442695
      %v1342 = vpow.pop %v1341
      %v1343 = vmul.f32 %v1288, 1.442695
      %v1344 = vpow.pop %v1343
      %v1345 = vmul.f32 %v1289, 1.442695
      %v1346 = vpow.pop %v1345
      %v1347 = vmul.f32 %v1290, 1.442695
      %v1348 = vpow.pop %v1347
      %v1349 = vmul.f32 %v1291, 1.442695
      %v1350 = vpow.pop %v1349
      %v1351 = vmul.f32 %v1292, 1.442695
      %v1352 = vpow.pop %v1351
      %v1353 = vmul.f32 %v1293, 1.442695
      %v1354 = vpow.pop %v1353
      %v1355 = vmul.f32 %v1294, 1.442695
      %v1356 = vpow.pop %v1355
      %v1357 = vmul.f32 %v1295, 1.442695
      %v1358 = vpow.pop %v1357
      %v1359 = vmul.f32 %v1296, 1.442695
      %v1360 = vpow.pop %v1359
      %v1361 = vadd.f32 %v1298, 1.0
      %v1362 = vadd.f32 %v1300, 1.0
      %v1363 = vadd.f32 %v1302, 1.0
      %v1364 = vadd.f32 %v1304, 1.0
      %v1365 = vadd.f32 %v1306, 1.0
      %v1366 = vadd.f32 %v1308, 1.0
      %v1367 = vadd.f32 %v1310, 1.0
      %v1368 = vadd.f32 %v1312, 1.0
      %v1369 = vadd.f32 %v1314, 1.0
      %v1370 = vadd.f32 %v1316, 1.0
      %v1371 = vadd.f32 %v1318, 1.0
      %v1372 = vadd.f32 %v1320, 1.0
      %v1373 = vadd.f32 %v1322, 1.0
      %v1374 = vadd.f32 %v1324, 1.0
      %v1375 = vadd.f32 %v1326, 1.0
      %v1376 = vadd.f32 %v1328, 1.0
      %v1377 = vadd.f32 %v1330, 1.0
      %v1378 = vadd.f32 %v1332, 1.0
      %v1379 = vadd.f32 %v1334, 1.0
      %v1380 = vadd.f32 %v1336, 1.0
      %v1381 = vadd.f32 %v1338, 1.0
      %v1382 = vadd.f32 %v1340, 1.0
      %v1383 = vadd.f32 %v1342, 1.0
      %v1384 = vadd.f32 %v1344, 1.0
      %v1385 = vadd.f32 %v1346, 1.0
      %v1386 = vadd.f32 %v1348, 1.0
      %v1387 = vadd.f32 %v1350, 1.0
      %v1388 = vadd.f32 %v1352, 1.0
      %v1389 = vadd.f32 %v1354, 1.0
      %v1390 = vadd.f32 %v1356, 1.0
      %v1391 = vadd.f32 %v1358, 1.0
      %v1392 = vadd.f32 %v1360, 1.0
      %v1393 = vrcp.pop %v1361
      %v1394 = vmul.f32 1.0, %v1393
      %v1395 = vrcp.pop %v1362
      %v1396 = vmul.f32 1.0, %v1395
      %v1397 = vrcp.pop %v1363
      %v1398 = vmul.f32 1.0, %v1397
      %v1399 = vrcp.pop %v1364
      %v1400 = vmul.f32 1.0, %v1399
      %v1401 = vrcp.pop %v1365
      %v1402 = vmul.f32 1.0, %v1401
      %v1403 = vrcp.pop %v1366
      %v1404 = vmul.f32 1.0, %v1403
      %v1405 = vrcp.pop %v1367
      %v1406 = vmul.f32 1.0, %v1405
      %v1407 = vrcp.pop %v1368
      %v1408 = vmul.f32 1.0, %v1407
      %v1409 = vrcp.pop %v1369
      %v1410 = vmul.f32 1.0, %v1409
      %v1411 = vrcp.pop %v1370
      %v1412 = vmul.f32 1.0, %v1411
      %v1413 = vrcp.pop %v1371
      %v1414 = vmul.f32 1.0, %v1413
      %v1415 = vrcp.pop %v1372
      %v1416 = vmul.f32 1.0, %v1415
      %v1417 = vrcp.pop %v1373
      %v1418 = vmul.f32 1.0, %v1417
      %v1419 = vrcp.pop %v1374
      %v1420 = vmul.f32 1.0, %v1419
      %v1421 = vrcp.pop %v1375
      %v1422 = vmul.f32 1.0, %v1421
      %v1423 = vrcp.pop %v1376
      %v1424 = vmul.f32 1.0, %v1423
      %v1425 = vrcp.pop %v1377
      %v1426 = vmul.f32 1.0, %v1425
      %v1427 = vrcp.pop %v1378
      %v1428 = vmul.f32 1.0, %v1427
      %v1429 = vrcp.pop %v1379
      %v1430 = vmul.f32 1.0, %v1429
      %v1431 = vrcp.pop %v1380
      %v1432 = vmul.f32 1.0, %v1431
      %v1433 = vrcp.pop %v1381
      %v1434 = vmul.f32 1.0, %v1433
      %v1435 = vrcp.pop %v1382
      %v1436 = vmul.f32 1.0, %v1435
      %v1437 = vrcp.pop %v1383
      %v1438 = vmul.f32 1.0, %v1437
      %v1439 = vrcp.pop %v1384
      %v1440 = vmul.f32 1.0, %v1439
      %v1441 = vrcp.pop %v1385
      %v1442 = vmul.f32 1.0, %v1441
      %v1443 = vrcp.pop %v1386
      %v1444 = vmul.f32 1.0, %v1443
      %v1445 = vrcp.pop %v1387
      %v1446 = vmul.f32 1.0, %v1445
      %v1447 = vrcp.pop %v1388
      %v1448 = vmul.f32 1.0, %v1447
      %v1449 = vrcp.pop %v1389
      %v1450 = vmul.f32 1.0, %v1449
      %v1451 = vrcp.pop %v1390
      %v1452 = vmul.f32 1.0, %v1451
      %v1453 = vrcp.pop %v1391
      %v1454 = vmul.f32 1.0, %v1453
      %v1455 = vrcp.pop %v1392
      %v1456 = vmul.f32 1.0, %v1455
      %1458 = vset.pattern.permute.xlu0 0
      %1459 = vperm.xlu0 %1458, %v1394
      %v1460 = vpop.permute.xlu0 %1459
      %1463 = vset.pattern.permute.xlu0 0
      %1464 = vperm.xlu0 %1463, %v1396
      %v1465 = vpop.permute.xlu0 %1464
      %1468 = vset.pattern.permute.xlu0 0
      %1469 = vperm.xlu0 %1468, %v1398
      %v1470 = vpop.permute.xlu0 %1469
      %1473 = vset.pattern.permute.xlu0 0
      %1474 = vperm.xlu0 %1473, %v1400
      %v1475 = vpop.permute.xlu0 %1474
      %1478 = vset.pattern.permute.xlu0 0
      %1479 = vperm.xlu0 %1478, %v1402
      %v1480 = vpop.permute.xlu0 %1479
      %1483 = vset.pattern.permute.xlu0 0
      %1484 = vperm.xlu0 %1483, %v1404
      %v1485 = vpop.permute.xlu0 %1484
      %1488 = vset.pattern.permute.xlu0 0
      %1489 = vperm.xlu0 %1488, %v1406
      %v1490 = vpop.permute.xlu0 %1489
      %1493 = vset.pattern.permute.xlu0 0
      %1494 = vperm.xlu0 %1493, %v1408
      %v1495 = vpop.permute.xlu0 %1494
      %1498 = vset.pattern.permute.xlu0 0
      %1499 = vperm.xlu0 %1498, %v1410
      %v1500 = vpop.permute.xlu0 %1499
      %1503 = vset.pattern.permute.xlu0 0
      %1504 = vperm.xlu0 %1503, %v1412
      %v1505 = vpop.permute.xlu0 %1504
      %1508 = vset.pattern.permute.xlu0 0
      %1509 = vperm.xlu0 %1508, %v1414
      %v1510 = vpop.permute.xlu0 %1509
      %1513 = vset.pattern.permute.xlu0 0
      %1514 = vperm.xlu0 %1513, %v1416
      %v1515 = vpop.permute.xlu0 %1514
      %1518 = vset.pattern.permute.xlu0 0
      %1519 = vperm.xlu0 %1518, %v1418
      %v1520 = vpop.permute.xlu0 %1519
      %1523 = vset.pattern.permute.xlu0 0
      %1524 = vperm.xlu0 %1523, %v1420
      %v1525 = vpop.permute.xlu0 %1524
      %1528 = vset.pattern.permute.xlu0 0
      %1529 = vperm.xlu0 %1528, %v1422
      %v1530 = vpop.permute.xlu0 %1529
      %1533 = vset.pattern.permute.xlu0 0
      %1534 = vperm.xlu0 %1533, %v1424
      %v1535 = vpop.permute.xlu0 %1534
      %1538 = vset.pattern.permute.xlu0 0
      %1539 = vperm.xlu0 %1538, %v1426
      %v1540 = vpop.permute.xlu0 %1539
      %1543 = vset.pattern.permute.xlu0 0
      %1544 = vperm.xlu0 %1543, %v1428
      %v1545 = vpop.permute.xlu0 %1544
      %1548 = vset.pattern.permute.xlu0 0
      %1549 = vperm.xlu0 %1548, %v1430
      %v1550 = vpop.permute.xlu0 %1549
      %1553 = vset.pattern.permute.xlu0 0
      %1554 = vperm.xlu0 %1553, %v1432
      %v1555 = vpop.permute.xlu0 %1554
      %1558 = vset.pattern.permute.xlu0 0
      %1559 = vperm.xlu0 %1558, %v1434
      %v1560 = vpop.permute.xlu0 %1559
      %1563 = vset.pattern.permute.xlu0 0
      %1564 = vperm.xlu0 %1563, %v1436
      %v1565 = vpop.permute.xlu0 %1564
      %1568 = vset.pattern.permute.xlu0 0
      %1569 = vperm.xlu0 %1568, %v1438
      %v1570 = vpop.permute.xlu0 %1569
      %1573 = vset.pattern.permute.xlu0 0
      %1574 = vperm.xlu0 %1573, %v1440
      %v1575 = vpop.permute.xlu0 %1574
      %1578 = vset.pattern.permute.xlu0 0
      %1579 = vperm.xlu0 %1578, %v1442
      %v1580 = vpop.permute.xlu0 %1579
      %1583 = vset.pattern.permute.xlu0 0
      %1584 = vperm.xlu0 %1583, %v1444
      %v1585 = vpop.permute.xlu0 %1584
      %1588 = vset.pattern.permute.xlu0 0
      %1589 = vperm.xlu0 %1588, %v1446
      %v1590 = vpop.permute.xlu0 %1589
      %1593 = vset.pattern.permute.xlu0 0
      %1594 = vperm.xlu0 %1593, %v1448
      %v1595 = vpop.permute.xlu0 %1594
      %1598 = vset.pattern.permute.xlu0 0
      %1599 = vperm.xlu0 %1598, %v1450
      %v1600 = vpop.permute.xlu0 %1599
      %1603 = vset.pattern.permute.xlu0 0
      %1604 = vperm.xlu0 %1603, %v1452
      %v1605 = vpop.permute.xlu0 %1604
      %1608 = vset.pattern.permute.xlu0 0
      %1609 = vperm.xlu0 %1608, %v1454
      %v1610 = vpop.permute.xlu0 %1609
      %1613 = vset.pattern.permute.xlu0 0
      %1614 = vperm.xlu0 %1613, %v1456
      %v1615 = vpop.permute.xlu0 %1614
      %v1617 = vmul.f32 %v678, %v1460
      %v1618 = vmul.f32 %v679, %v1465
      %v1619 = vmul.f32 %v680, %v1470
      %v1620 = vmul.f32 %v681, %v1475
      %v1621 = vmul.f32 %v682, %v1480
      %v1622 = vmul.f32 %v683, %v1485
      %v1623 = vmul.f32 %v684, %v1490
      %v1624 = vmul.f32 %v685, %v1495
      %v1625 = vmul.f32 %v686, %v1500
      %v1626 = vmul.f32 %v687, %v1505
      %v1627 = vmul.f32 %v688, %v1510
      %v1628 = vmul.f32 %v689, %v1515
      %v1629 = vmul.f32 %v690, %v1520
      %v1630 = vmul.f32 %v691, %v1525
      %v1631 = vmul.f32 %v692, %v1530
      %v1632 = vmul.f32 %v693, %v1535
      %v1633 = vmul.f32 %v694, %v1540
      %v1634 = vmul.f32 %v695, %v1545
      %v1635 = vmul.f32 %v696, %v1550
      %v1636 = vmul.f32 %v697, %v1555
      %v1637 = vmul.f32 %v698, %v1560
      %v1638 = vmul.f32 %v699, %v1565
      %v1639 = vmul.f32 %v700, %v1570
      %v1640 = vmul.f32 %v701, %v1575
      %v1641 = vmul.f32 %v702, %v1580
      %v1642 = vmul.f32 %v703, %v1585
      %v1643 = vmul.f32 %v704, %v1590
      %v1644 = vmul.f32 %v705, %v1595
      %v1645 = vmul.f32 %v706, %v1600
      %v1646 = vmul.f32 %v707, %v1605
      %v1647 = vmul.f32 %v708, %v1610
      %v1648 = vmul.f32 %v709, %v1615
      %1649 = vset.pattern.permute.xlu0 1
      %1650 = vperm.xlu0 %1649, %v1394
      %v1651 = vpop.permute.xlu0 %1650
      %1653 = vset.pattern.permute.xlu0 1
      %1654 = vperm.xlu0 %1653, %v1396
      %v1655 = vpop.permute.xlu0 %1654
      %1657 = vset.pattern.permute.xlu0 1
      %1658 = vperm.xlu0 %1657, %v1398
      %v1659 = vpop.permute.xlu0 %1658
      %1661 = vset.pattern.permute.xlu0 1
      %1662 = vperm.xlu0 %1661, %v1400
      %v1663 = vpop.permute.xlu0 %1662
      %1665 = vset.pattern.permute.xlu0 1
      %1666 = vperm.xlu0 %1665, %v1402
      %v1667 = vpop.permute.xlu0 %1666
      %1669 = vset.pattern.permute.xlu0 1
      %1670 = vperm.xlu0 %1669, %v1404
      %v1671 = vpop.permute.xlu0 %1670
      %1673 = vset.pattern.permute.xlu0 1
      %1674 = vperm.xlu0 %1673, %v1406
      %v1675 = vpop.permute.xlu0 %1674
      %1677 = vset.pattern.permute.xlu0 1
      %1678 = vperm.xlu0 %1677, %v1408
      %v1679 = vpop.permute.xlu0 %1678
      %1681 = vset.pattern.permute.xlu0 1
      %1682 = vperm.xlu0 %1681, %v1410
      %v1683 = vpop.permute.xlu0 %1682
      %1685 = vset.pattern.permute.xlu0 1
      %1686 = vperm.xlu0 %1685, %v1412
      %v1687 = vpop.permute.xlu0 %1686
      %1689 = vset.pattern.permute.xlu0 1
      %1690 = vperm.xlu0 %1689, %v1414
      %v1691 = vpop.permute.xlu0 %1690
      %1693 = vset.pattern.permute.xlu0 1
      %1694 = vperm.xlu0 %1693, %v1416
      %v1695 = vpop.permute.xlu0 %1694
      %1697 = vset.pattern.permute.xlu0 1
      %1698 = vperm.xlu0 %1697, %v1418
      %v1699 = vpop.permute.xlu0 %1698
      %1701 = vset.pattern.permute.xlu0 1
      %1702 = vperm.xlu0 %1701, %v1420
      %v1703 = vpop.permute.xlu0 %1702
      %1705 = vset.pattern.permute.xlu0 1
      %1706 = vperm.xlu0 %1705, %v1422
      %v1707 = vpop.permute.xlu0 %1706
      %1709 = vset.pattern.permute.xlu0 1
      %1710 = vperm.xlu0 %1709, %v1424
      %v1711 = vpop.permute.xlu0 %1710
      %1713 = vset.pattern.permute.xlu0 1
      %1714 = vperm.xlu0 %1713, %v1426
      %v1715 = vpop.permute.xlu0 %1714
      %1717 = vset.pattern.permute.xlu0 1
      %1718 = vperm.xlu0 %1717, %v1428
      %v1719 = vpop.permute.xlu0 %1718
      %1721 = vset.pattern.permute.xlu0 1
      %1722 = vperm.xlu0 %1721, %v1430
      %v1723 = vpop.permute.xlu0 %1722
      %1725 = vset.pattern.permute.xlu0 1
      %1726 = vperm.xlu0 %1725, %v1432
      %v1727 = vpop.permute.xlu0 %1726
      %1729 = vset.pattern.permute.xlu0 1
      %1730 = vperm.xlu0 %1729, %v1434
      %v1731 = vpop.permute.xlu0 %1730
      %1733 = vset.pattern.permute.xlu0 1
      %1734 = vperm.xlu0 %1733, %v1436
      %v1735 = vpop.permute.xlu0 %1734
      %1737 = vset.pattern.permute.xlu0 1
      %1738 = vperm.xlu0 %1737, %v1438
      %v1739 = vpop.permute.xlu0 %1738
      %1741 = vset.pattern.permute.xlu0 1
      %1742 = vperm.xlu0 %1741, %v1440
      %v1743 = vpop.permute.xlu0 %1742
      %1745 = vset.pattern.permute.xlu0 1
      %1746 = vperm.xlu0 %1745, %v1442
      %v1747 = vpop.permute.xlu0 %1746
      %1749 = vset.pattern.permute.xlu0 1
      %1750 = vperm.xlu0 %1749, %v1444
      %v1751 = vpop.permute.xlu0 %1750
      %1753 = vset.pattern.permute.xlu0 1
      %1754 = vperm.xlu0 %1753, %v1446
      %v1755 = vpop.permute.xlu0 %1754
      %1757 = vset.pattern.permute.xlu0 1
      %1758 = vperm.xlu0 %1757, %v1448
      %v1759 = vpop.permute.xlu0 %1758
      %1761 = vset.pattern.permute.xlu0 1
      %1762 = vperm.xlu0 %1761, %v1450
      %v1763 = vpop.permute.xlu0 %1762
      %1765 = vset.pattern.permute.xlu0 1
      %1766 = vperm.xlu0 %1765, %v1452
      %v1767 = vpop.permute.xlu0 %1766
      %1769 = vset.pattern.permute.xlu0 1
      %1770 = vperm.xlu0 %1769, %v1454
      %v1771 = vpop.permute.xlu0 %1770
      %1773 = vset.pattern.permute.xlu0 1
      %1774 = vperm.xlu0 %1773, %v1456
      %v1775 = vpop.permute.xlu0 %1774
      %v1777 = vmul.f32 %v742, %v1651
      %v1778 = vmul.f32 %v743, %v1655
      %v1779 = vmul.f32 %v744, %v1659
      %v1780 = vmul.f32 %v745, %v1663
      %v1781 = vmul.f32 %v746, %v1667
      %v1782 = vmul.f32 %v747, %v1671
      %v1783 = vmul.f32 %v748, %v1675
      %v1784 = vmul.f32 %v749, %v1679
      %v1785 = vmul.f32 %v750, %v1683
      %v1786 = vmul.f32 %v751, %v1687
      %v1787 = vmul.f32 %v752, %v1691
      %v1788 = vmul.f32 %v753, %v1695
      %v1789 = vmul.f32 %v754, %v1699
      %v1790 = vmul.f32 %v755, %v1703
      %v1791 = vmul.f32 %v756, %v1707
      %v1792 = vmul.f32 %v757, %v1711
      %v1793 = vmul.f32 %v758, %v1715
      %v1794 = vmul.f32 %v759, %v1719
      %v1795 = vmul.f32 %v760, %v1723
      %v1796 = vmul.f32 %v761, %v1727
      %v1797 = vmul.f32 %v762, %v1731
      %v1798 = vmul.f32 %v763, %v1735
      %v1799 = vmul.f32 %v764, %v1739
      %v1800 = vmul.f32 %v765, %v1743
      %v1801 = vmul.f32 %v766, %v1747
      %v1802 = vmul.f32 %v767, %v1751
      %v1803 = vmul.f32 %v768, %v1755
      %v1804 = vmul.f32 %v769, %v1759
      %v1805 = vmul.f32 %v770, %v1763
      %v1806 = vmul.f32 %v771, %v1767
      %v1807 = vmul.f32 %v772, %v1771
      %v1808 = vmul.f32 %v773, %v1775
      %v1809 = vadd.f32 %v1617, %v1777
      %v1810 = vadd.f32 %v1618, %v1778
      %v1811 = vadd.f32 %v1619, %v1779
      %v1812 = vadd.f32 %v1620, %v1780
      %v1813 = vadd.f32 %v1621, %v1781
      %v1814 = vadd.f32 %v1622, %v1782
      %v1815 = vadd.f32 %v1623, %v1783
      %v1816 = vadd.f32 %v1624, %v1784
      %v1817 = vadd.f32 %v1625, %v1785
      %v1818 = vadd.f32 %v1626, %v1786
      %v1819 = vadd.f32 %v1627, %v1787
      %v1820 = vadd.f32 %v1628, %v1788
      %v1821 = vadd.f32 %v1629, %v1789
      %v1822 = vadd.f32 %v1630, %v1790
      %v1823 = vadd.f32 %v1631, %v1791
      %v1824 = vadd.f32 %v1632, %v1792
      %v1825 = vadd.f32 %v1633, %v1793
      %v1826 = vadd.f32 %v1634, %v1794
      %v1827 = vadd.f32 %v1635, %v1795
      %v1828 = vadd.f32 %v1636, %v1796
      %v1829 = vadd.f32 %v1637, %v1797
      %v1830 = vadd.f32 %v1638, %v1798
      %v1831 = vadd.f32 %v1639, %v1799
      %v1832 = vadd.f32 %v1640, %v1800
      %v1833 = vadd.f32 %v1641, %v1801
      %v1834 = vadd.f32 %v1642, %v1802
      %v1835 = vadd.f32 %v1643, %v1803
      %v1836 = vadd.f32 %v1644, %v1804
      %v1837 = vadd.f32 %v1645, %v1805
      %v1838 = vadd.f32 %v1646, %v1806
      %v1839 = vadd.f32 %v1647, %v1807
      %v1840 = vadd.f32 %v1648, %v1808
      %1841 = vst.msk [vmem:[%s302] sm:$0xff] %vm418, %v1809
      %1842 = vst.msk [vmem:[%s302 + $0x8] sm:$0xff] %vm418, %v1810
      %1843 = vst.msk [vmem:[%s302 + $0x10] sm:$0xff] %vm418, %v1811
      %1844 = vst.msk [vmem:[%s302 + $0x18] sm:$0xff] %vm418, %v1812
      %1845 = vst.msk [vmem:[%s302 + $0x20] sm:$0xff] %vm418, %v1813
      %1846 = vst.msk [vmem:[%s302 + $0x28] sm:$0xff] %vm418, %v1814
      %1847 = vst.msk [vmem:[%s302 + $0x30] sm:$0xff] %vm418, %v1815
      %1848 = vst.msk [vmem:[%s302 + $0x38] sm:$0xff] %vm418, %v1816
      %1849 = vst.msk [vmem:[%s302 + $0x40] sm:$0xff] %vm418, %v1817
      %1850 = vst.msk [vmem:[%s302 + $0x48] sm:$0xff] %vm418, %v1818
      %1851 = vst.msk [vmem:[%s302 + $0x50] sm:$0xff] %vm418, %v1819
      %1852 = vst.msk [vmem:[%s302 + $0x58] sm:$0xff] %vm418, %v1820
      %1853 = vst.msk [vmem:[%s302 + $0x60] sm:$0xff] %vm418, %v1821
      %1854 = vst.msk [vmem:[%s302 + $0x68] sm:$0xff] %vm418, %v1822
      %1855 = vst.msk [vmem:[%s302 + $0x70] sm:$0xff] %vm418, %v1823
      %1856 = vst.msk [vmem:[%s302 + $0x78] sm:$0xff] %vm418, %v1824
      %1857 = vst.msk [vmem:[%s302 + $0x80] sm:$0xff] %vm418, %v1825
      %1858 = vst.msk [vmem:[%s302 + $0x88] sm:$0xff] %vm418, %v1826
      %1859 = vst.msk [vmem:[%s302 + $0x90] sm:$0xff] %vm418, %v1827
      %1860 = vst.msk [vmem:[%s302 + $0x98] sm:$0xff] %vm418, %v1828
      %1861 = vst.msk [vmem:[%s302 + $0xa0] sm:$0xff] %vm418, %v1829
      %1862 = vst.msk [vmem:[%s302 + $0xa8] sm:$0xff] %vm418, %v1830
      %1863 = vst.msk [vmem:[%s302 + $0xb0] sm:$0xff] %vm418, %v1831
      %1864 = vst.msk [vmem:[%s302 + $0xb8] sm:$0xff] %vm418, %v1832
      %1865 = vst.msk [vmem:[%s302 + $0xc0] sm:$0xff] %vm418, %v1833
      %1866 = vst.msk [vmem:[%s302 + $0xc8] sm:$0xff] %vm418, %v1834
      %1867 = vst.msk [vmem:[%s302 + $0xd0] sm:$0xff] %vm418, %v1835
      %1868 = vst.msk [vmem:[%s302 + $0xd8] sm:$0xff] %vm418, %v1836
      %1869 = vst.msk [vmem:[%s302 + $0xe0] sm:$0xff] %vm418, %v1837
      %1870 = vst.msk [vmem:[%s302 + $0xe8] sm:$0xff] %vm418, %v1838
      %1871 = vst.msk [vmem:[%s302 + $0xf0] sm:$0xff] %vm418, %v1839
      %1872 = vst.msk [vmem:[%s302 + $0xf8] sm:$0xff] %vm418, %v1840
      %s1873 = smul.u32 32, %s18
      %p1874 = scmp.lt.s32.totalorder %s1873, 63
      %s1875 = scalar_select %p1874, %s1873, 63
      %s1876 = smul.addr %s1875, 8
      %s1877 = scalar_lea.vmem %s7, %s1876
      // Predicated region
      $region49: #{abf_forward.2} parent=47 // pred_check
        %p1878 = pneg %p193
      $region50: #{abf_forward.2} parent=47 // pred_check_branch
        %1880 = sbr.rel (%p1878) target = $region52
      $region51: #{abf_forward.2} parent=47 // pred_region
        %s1881 = smul.u32 32, %s18
      $region52: #{abf_forward.2} parent=47 // pred_fallthru
        _
    $region48: #{abf_forward.2} parent=5 // pred_fallthru
      _
    %p1882 = scmp.le.s32.totalorder 2, %s13
    // Predicated region
    $region53: #{abf_forward.2} parent=5 // pred_check
      %p1883 = pneg %p1882
    $region54: #{abf_forward.2} parent=5 // pred_check_branch
      %1885 = sbr.rel (%p1883) target = $region56
    $region55: #{abf_forward.2} parent=5 // pred_region
      %s1886 = ssub.s32 %s13, 2
      // Predicated region
      $region57: #{abf_forward.2} parent=55 // pred_check
        %p1887 = pneg %p199
      $region58: #{abf_forward.2} parent=55 // pred_check_branch
        %1889 = sbr.rel (%p1887) target = $region60
      $region59: #{abf_forward.2} parent=55 // pred_region
        %s1890 = smul.u32 32, %s19
        %p1891 = scmp.lt.s32.totalorder %s1890, 63
        %s1892 = scalar_select %p1891, %s1890, 63
        %s1893 = smul.addr %s1892, 8
        %s1894 = scalar_lea.vmem %s7, %s1893
      $region60: #{abf_forward.2} parent=55 // pred_fallthru
        _
    $region56: #{abf_forward.2} parent=5 // pred_fallthru
      _
  $region6: #{abf_forward.2} parent=0 // loop_footer
    %s17 = sadd.s32 1, %s13
  $region7: #{abf_forward.2} parent=0 // loop_footer_branch
    %12 = sbr.rel target = $region3
  $region8: #{abf_forward.2} parent=0 // loop_exit
    _

// kernel: abf_forward.3
$region0: #{abf_forward.3}
  #allocation0 [shape = 'u32[]', space=smem, size = 0x4, offset = 0x4, fixed_abs, tag = 'smem constant byte address 0x4 - core index']
  #allocation1 [shape = 'u32[144,128]{1,0:T(1,128)}', space=vmem, size = 0x12000, scoped, tag = 'internal scratch']
  %s0 = inlined_call_operand.vmem [shape: bf16[2,102,8], index: 0, kind: input, shape index: {}]
  %s1 = inlined_call_operand.vmem [shape: f32[72,8], index: 1, kind: input, shape index: {}]
  %s2 = inlined_call_operand.vmem [shape: f32[1,8], index: 2, kind: input, shape index: {}]
  %s3 = inlined_call_operand.vmem [shape: f32[1,8], index: 3, kind: input, shape index: {}]
  %s4 = inlined_call_operand.vmem [shape: f32[2,80,8], index: 4, kind: output, shape index: {}]
  %s5 = sld [smem:[#allocation0]]
  $region49: #{abf_forward.3} parent=0
    _
  %s7 = ssub.s32 1, %s5
  %s8 = scalar_select 0, %s7, %s5
  loop: start=0, step=1, limit=4
  $region2: #{abf_forward.3} parent=0 // loop_pre_header
    _
  $region3: #{abf_forward.3} parent=0 // loop_header
    %s10 = sphi 0, %s14
    %p11 = scmp.ge.s32.totalorder %s10, 4
    %s20 = sphi 0, %s22
    %s23 = sphi 0, %s20
    %s24 = sphi 0, %s23
    %s40 = sphi 0, %s24
    %s44 = sphi 0, %s44
    %s46 = sphi 0, %s44
    %s47 = sphi 0, %s46
    %s61 = sphi 0, %s47
    %s65 = sphi 0, %s65
    %s67 = sphi 0, %s65
    %s68 = sphi 0, %s67
    %s82 = sphi 0, %s68
    %s86 = sphi 0, %s86
    %s88 = sphi 0, %s86
    %s89 = sphi 0, %s88
    %s103 = sphi 0, %s89
    %s109 = sphi 0, %s111
    %s112 = sphi 0, %s109
    %s113 = sphi 0, %s112
    %s129 = sphi 0, %s113
  $region4: #{abf_forward.3} parent=0 // loop_header_branch
    %13 = sbr.rel (%p11) target = $region8
  $region5: #{abf_forward.3} parent=0 // loop_body
    %s15 = ssub.s32 %s10, 1
    %s16 = ssub.s32 %s10, 2
    %s17 = sadd.s32 %s10, 1
    %s18 = ssub.s32 %s10, %s17
    %p19 = scmp.eq.s32.totalorder %s18, 0
    %s21 = sadd.s32 %s20, 1
    %s22 = scalar_select %p19, %s20, %s21
    %p25 = pneg %p19
    %p26 = scmp.eq.s32.totalorder %s10, 1
    %p27 = por %p25, %p26
    %p28 = scmp.ne.s32.totalorder %s20, %s23
    %p29 = scmp.eq.s32.totalorder %s10, 0
    %p30 = por %p28, %p29
    %p31 = scmp.ne.s32.totalorder %s20, %s23
    %p32 = scmp.eq.s32.totalorder %s15, 1
    %p33 = por %p31, %p32
    %p34 = scmp.ne.s32.totalorder %s23, %s24
    %p35 = scmp.eq.s32.totalorder %s15, 0
    %p36 = por %p34, %p35
    %p37 = scmp.ne.s32.totalorder %s23, %s24
    %p38 = scmp.eq.s32.totalorder %s16, 1
    %p39 = por %p37, %p38
    %p41 = scmp.ne.s32.totalorder %s24, %s40
    %p42 = scmp.eq.s32.totalorder %s16, 0
    %p43 = por %p41, %p42
    %s45 = sadd.s32 %s44, 1
    %p48 = scmp.eq.s32.totalorder %s10, 1
    %p49 = scmp.ne.s32.totalorder %s44, %s46
    %p50 = scmp.eq.s32.totalorder %s10, 0
    %p51 = por %p49, %p50
    %p52 = scmp.ne.s32.totalorder %s44, %s46
    %p53 = scmp.eq.s32.totalorder %s15, 1
    %p54 = por %p52, %p53
    %p55 = scmp.ne.s32.totalorder %s46, %s47
    %p56 = scmp.eq.s32.totalorder %s15, 0
    %p57 = por %p55, %p56
    %p58 = scmp.ne.s32.totalorder %s46, %s47
    %p59 = scmp.eq.s32.totalorder %s16, 1
    %p60 = por %p58, %p59
    %p62 = scmp.ne.s32.totalorder %s47, %s61
    %p63 = scmp.eq.s32.totalorder %s16, 0
    %p64 = por %p62, %p63
    %s66 = sadd.s32 %s65, 1
    %p69 = scmp.eq.s32.totalorder %s10, 1
    %p70 = scmp.ne.s32.totalorder %s65, %s67
    %p71 = scmp.eq.s32.totalorder %s10, 0
    %p72 = por %p70, %p71
    %p73 = scmp.ne.s32.totalorder %s65, %s67
    %p74 = scmp.eq.s32.totalorder %s15, 1
    %p75 = por %p73, %p74
    %p76 = scmp.ne.s32.totalorder %s67, %s68
    %p77 = scmp.eq.s32.totalorder %s15, 0
    %p78 = por %p76, %p77
    %p79 = scmp.ne.s32.totalorder %s67, %s68
    %p80 = scmp.eq.s32.totalorder %s16, 1
    %p81 = por %p79, %p80
    %p83 = scmp.ne.s32.totalorder %s68, %s82
    %p84 = scmp.eq.s32.totalorder %s16, 0
    %p85 = por %p83, %p84
    %s87 = sadd.s32 %s86, 1
    %p90 = scmp.eq.s32.totalorder %s10, 1
    %p91 = scmp.ne.s32.totalorder %s86, %s88
    %p92 = scmp.eq.s32.totalorder %s10, 0
    %p93 = por %p91, %p92
    %p94 = scmp.ne.s32.totalorder %s86, %s88
    %p95 = scmp.eq.s32.totalorder %s15, 1
    %p96 = por %p94, %p95
    %p97 = scmp.ne.s32.totalorder %s88, %s89
    %p98 = scmp.eq.s32.totalorder %s15, 0
    %p99 = por %p97, %p98
    %p100 = scmp.ne.s32.totalorder %s88, %s89
    %p101 = scmp.eq.s32.totalorder %s16, 1
    %p102 = por %p100, %p101
    %p104 = scmp.ne.s32.totalorder %s89, %s103
    %p105 = scmp.eq.s32.totalorder %s16, 0
    %p106 = por %p104, %p105
    %s107 = ssub.s32 %s10, %s17
    %p108 = scmp.eq.s32.totalorder %s107, 0
    %s110 = sadd.s32 %s109, 1
    %s111 = scalar_select %p108, %s109, %s110
    %p114 = pneg %p108
    %p115 = scmp.eq.s32.totalorder %s10, 1
    %p116 = por %p114, %p115
    %p117 = scmp.ne.s32.totalorder %s109, %s112
    %p118 = scmp.eq.s32.totalorder %s10, 0
    %p119 = por %p117, %p118
    %p120 = scmp.ne.s32.totalorder %s109, %s112
    %p121 = scmp.eq.s32.totalorder %s15, 1
    %p122 = por %p120, %p121
    %p123 = scmp.ne.s32.totalorder %s112, %s113
    %p124 = scmp.eq.s32.totalorder %s15, 0
    %p125 = por %p123, %p124
    %p126 = scmp.ne.s32.totalorder %s112, %s113
    %p127 = scmp.eq.s32.totalorder %s16, 1
    %p128 = por %p126, %p127
    %p130 = scmp.ne.s32.totalorder %s113, %s129
    %p131 = scmp.eq.s32.totalorder %s16, 0
    %p132 = por %p130, %p131
    %p133 = scmp.le.s32.totalorder 1, %s10
    %p134 = scmp.lt.s32.totalorder %s10, 3
    %p135 = pnand %p133, %p134
    %p136 = pneg %p135
    // Predicated region
    $region9: #{abf_forward.3} parent=5 // pred_check
      _
    $region10: #{abf_forward.3} parent=5 // pred_check_branch
      %138 = sbr.rel (%p135) target = $region12
    $region11: #{abf_forward.3} parent=5 // pred_region
      %s139 = ssub.s32 %s10, 1
      // Predicated region
      $region13: #{abf_forward.3} parent=11 // pred_check
        %p140 = pneg %p57
      $region14: #{abf_forward.3} parent=11 // pred_check_branch
        %142 = sbr.rel (%p140) target = $region16
      $region15: #{abf_forward.3} parent=11 // pred_region
        _
      $region16: #{abf_forward.3} parent=11 // pred_fallthru
        _
      // Predicated region
      $region17: #{abf_forward.3} parent=11 // pred_check
        %p143 = pneg %p78
      $region18: #{abf_forward.3} parent=11 // pred_check_branch
        %145 = sbr.rel (%p143) target = $region20
      $region19: #{abf_forward.3} parent=11 // pred_region
        _
      $region20: #{abf_forward.3} parent=11 // pred_fallthru
        _
      // Predicated region
      $region21: #{abf_forward.3} parent=11 // pred_check
        %p146 = pneg %p99
      $region22: #{abf_forward.3} parent=11 // pred_check_branch
        %148 = sbr.rel (%p146) target = $region24
      $region23: #{abf_forward.3} parent=11 // pred_region
        _
      $region24: #{abf_forward.3} parent=11 // pred_fallthru
        _
    $region12: #{abf_forward.3} parent=5 // pred_fallthru
      _
    %p149 = scmp.lt.s32.totalorder %s10, 2
    // Predicated region
    $region25: #{abf_forward.3} parent=5 // pred_check
      %p150 = pneg %p149
    $region26: #{abf_forward.3} parent=5 // pred_check_branch
      %152 = sbr.rel (%p150) target = $region28
    $region27: #{abf_forward.3} parent=5 // pred_region
      // Predicated region
      $region29: #{abf_forward.3} parent=27 // pred_check
        %p153 = pneg %p30
      $region30: #{abf_forward.3} parent=27 // pred_check_branch
        %155 = sbr.rel (%p153) target = $region32
      $region31: #{abf_forward.3} parent=27 // pred_region
        %p156 = scmp.lt.s32.totalorder %s10, 1
        %s157 = scalar_select %p156, %s10, 1
        %s158 = smul.addr %s157, 13
        %s159 = smul.addr %s158, 4
        %s160 = scalar_lea.vmem %s0, %s159
      $region32: #{abf_forward.3} parent=27 // pred_fallthru
        _
    $region28: #{abf_forward.3} parent=5 // pred_fallthru
      _
    %p161 = scmp.le.s32.totalorder 1, %s10
    %p162 = scmp.lt.s32.totalorder %s10, 3
    %p163 = pnand %p161, %p162
    %p164 = pneg %p163
    // Predicated region
    $region33: #{abf_forward.3} parent=5 // pred_check
      _
    $region34: #{abf_forward.3} parent=5 // pred_check_branch
      %166 = sbr.rel (%p163) target = $region36
    $region35: #{abf_forward.3} parent=5 // pred_region
      %s167 = ssub.s32 %s10, 1
      %p168 = scmp.lt.s32.totalorder %s15, 1
      %s169 = scalar_select %p168, %s15, 1
      %s170 = smul.addr %s169, 13
      %s171 = smul.addr %s170, 4
      %s172 = scalar_lea.vmem %s0, %s171
      %p173 = pneg %p36
      %p174 = pneg %p33
      %p175 = pneg %p57
      %p176 = pneg %p54
      %p177 = pneg %p78
      %p178 = pneg %p75
      %p179 = pneg %p99
      %p180 = pneg %p96
      %p181 = pneg %p125
      %p182 = pneg %p122
      %p183 = scmp.lt.s32.totalorder %s15, 1
      %s184 = scalar_select %p183, %s15, 1
      %s185 = smul.addr %s184, 10
      %s186 = smul.addr %s185, 8
      %s187 = scalar_lea.vmem %s4, %s186
      %p188 = scmp.lt.s32.totalorder %s15, 1
      %s189 = scalar_select %p188, %s15, 1
      %s190 = smul.addr %s189, 13
      %s191 = smul.addr %s190, 4
      %s192 = scalar_lea.vmem %s0, %s191
      %p193 = scmp.lt.s32.totalorder %s15, 1
      %s194 = scalar_select %p193, %s15, 1
      %s195 = smul.addr %s194, 10
      %s196 = smul.addr %s195, 8
      %s197 = scalar_lea.vmem %s4, %s196
      %v198 = vld [vmem:[%s1] sm:$0xff]
      %v199 = vld [vmem:[%s1 + $0x8] sm:$0xff]
      %v200 = vld [vmem:[%s1 + $0x10] sm:$0xff]
      %v201 = vld [vmem:[%s1 + $0x18] sm:$0xff]
      %v202 = vld [vmem:[%s1 + $0x20] sm:$0xff]
      %v203 = vld [vmem:[%s1 + $0x28] sm:$0xff]
      %v204 = vld [vmem:[%s1 + $0x30] sm:$0xff]
      %v205 = vld [vmem:[%s1 + $0x38] sm:$0xff]
      %v206 = vld [vmem:[%s1 + $0x40] sm:$0xff]
      %v207 = vld [vmem:[%s2] sm:$0x1]
      %v208 = vld [vmem:[%s3] sm:$0x1]
      %v209 = vld [vmem:[%s192] sm:$0xf]
      %v210 = vld [vmem:[%s192 + $0x4] sm:$0xf]
      %v211 = vld [vmem:[%s192 + $0x8] sm:$0xf]
      %v212 = vld [vmem:[%s192 + $0xc] sm:$0xf]
      %v213 = vld [vmem:[%s192 + $0x10] sm:$0xf]
      %v214 = vld [vmem:[%s192 + $0x14] sm:$0xf]
      %v215 = vld [vmem:[%s192 + $0x18] sm:$0xf]
      %v216 = vld [vmem:[%s192 + $0x1c] sm:$0xf]
      %v217 = vld [vmem:[%s192 + $0x20] sm:$0xf]
      %v218 = vld [vmem:[%s192 + $0x24] sm:$0xf]
      %v219 = vld [vmem:[%s192 + $0x28] sm:$0xf]
      %v220 = vld [vmem:[%s192 + $0x2c] sm:$0xf]
      %v221 = vld [vmem:[%s192 + $0x30] sm:$0x7]
      %v222 = vunpack.c.l.bf16 %v209
      %v223 = vunpack.c.l.bf16 %v210
      %v224 = vunpack.c.l.bf16 %v211
      %v225 = vunpack.c.l.bf16 %v212
      %v226 = vunpack.c.l.bf16 %v213
      %v227 = vunpack.c.l.bf16 %v214
      %v228 = vunpack.c.l.bf16 %v215
      %v229 = vunpack.c.l.bf16 %v216
      %v230 = vunpack.c.l.bf16 %v217
      %v231 = vunpack.c.l.bf16 %v218
      %v232 = vunpack.c.l.bf16 %v219
      %v233 = vunpack.c.l.bf16 %v220
      %v234 = vunpack.c.l.bf16 %v221
      %vm246 = vcmask 1046528
      %v247 = vrot.slane %v222, 1
      %v248 = vrot.slane %v223, 1
      %v249 = vsel %vm246, %v247, %v248
      %v250 = vrot.slane %v224, 1
      %v251 = vsel %vm246, %v248, %v250
      %v252 = vrot.slane %v225, 1
      %v253 = vsel %vm246, %v250, %v252
      %v254 = vrot.slane %v226, 1
      %v255 = vsel %vm246, %v252, %v254
      %v256 = vrot.slane %v227, 1
      %v257 = vsel %vm246, %v254, %v256
      %v258 = vrot.slane %v228, 1
      %v259 = vsel %vm246, %v256, %v258
      %v260 = vrot.slane %v229, 1
      %v261 = vsel %vm246, %v258, %v260
      %v262 = vrot.slane %v230, 1
      %v263 = vsel %vm246, %v260, %v262
      %v264 = vrot.slane %v231, 1
      %v265 = vsel %vm246, %v262, %v264
      %v266 = vrot.slane %v232, 1
      %v267 = vsel %vm246, %v264, %v266
      %268 = vrot.lane.b32.xlu0 %v249, 8
      %v269 = vpop.permute.xlu0 %268
      %270 = vrot.lane.b32.xlu0 %v251, 8
      %v271 = vpop.permute.xlu0 %270
      %272 = vrot.lane.b32.xlu0 %v253, 8
      %v273 = vpop.permute.xlu0 %272
      %274 = vrot.lane.b32.xlu0 %v255, 8
      %v275 = vpop.permute.xlu0 %274
      %276 = vrot.lane.b32.xlu0 %v257, 8
      %v277 = vpop.permute.xlu0 %276
      %278 = vrot.lane.b32.xlu0 %v259, 8
      %v279 = vpop.permute.xlu0 %278
      %280 = vrot.lane.b32.xlu0 %v261, 8
      %v281 = vpop.permute.xlu0 %280
      %282 = vrot.lane.b32.xlu0 %v263, 8
      %v283 = vpop.permute.xlu0 %282
      %284 = vrot.lane.b32.xlu0 %v265, 8
      %v285 = vpop.permute.xlu0 %284
      %286 = vrot.lane.b32.xlu0 %v267, 8
      %v287 = vpop.permute.xlu0 %286
      %vm298 = vcmask 1045504
      %v299 = vrot.slane %v222, 2
      %v300 = vrot.slane %v223, 2
      %v301 = vsel %vm298, %v299, %v300
      %v302 = vrot.slane %v224, 2
      %v303 = vsel %vm298, %v300, %v302
      %v304 = vrot.slane %v225, 2
      %v305 = vsel %vm298, %v302, %v304
      %v306 = vrot.slane %v226, 2
      %v307 = vsel %vm298, %v304, %v306
      %v308 = vrot.slane %v227, 2
      %v309 = vsel %vm298, %v306, %v308
      %v310 = vrot.slane %v228, 2
      %v311 = vsel %vm298, %v308, %v310
      %v312 = vrot.slane %v229, 2
      %v313 = vsel %vm298, %v310, %v312
      %v314 = vrot.slane %v230, 2
      %v315 = vsel %vm298, %v312, %v314
      %v316 = vrot.slane %v231, 2
      %v317 = vsel %vm298, %v314, %v316
      %v318 = vrot.slane %v232, 2
      %v319 = vsel %vm298, %v316, %v318
      %320 = vrot.lane.b32.xlu0 %v301, 16
      %v321 = vpop.permute.xlu0 %320
      %322 = vrot.lane.b32.xlu0 %v303, 16
      %v323 = vpop.permute.xlu0 %322
      %324 = vrot.lane.b32.xlu0 %v305, 16
      %v325 = vpop.permute.xlu0 %324
      %326 = vrot.lane.b32.xlu0 %v307, 16
      %v327 = vpop.permute.xlu0 %326
      %328 = vrot.lane.b32.xlu0 %v309, 16
      %v329 = vpop.permute.xlu0 %328
      %330 = vrot.lane.b32.xlu0 %v311, 16
      %v331 = vpop.permute.xlu0 %330
      %332 = vrot.lane.b32.xlu0 %v313, 16
      %v333 = vpop.permute.xlu0 %332
      %334 = vrot.lane.b32.xlu0 %v315, 16
      %v335 = vpop.permute.xlu0 %334
      %336 = vrot.lane.b32.xlu0 %v317, 16
      %v337 = vpop.permute.xlu0 %336
      %338 = vrot.lane.b32.xlu0 %v319, 16
      %v339 = vpop.permute.xlu0 %338
      %v351 = vrot.slane %v233, 2
      %v352 = vsel %vm298, %v318, %v351
      %353 = vrot.lane.b32.xlu0 %v303, 24
      %v354 = vpop.permute.xlu0 %353
      %355 = vrot.lane.b32.xlu0 %v305, 24
      %v356 = vpop.permute.xlu0 %355
      %357 = vrot.lane.b32.xlu0 %v307, 24
      %v358 = vpop.permute.xlu0 %357
      %359 = vrot.lane.b32.xlu0 %v309, 24
      %v360 = vpop.permute.xlu0 %359
      %361 = vrot.lane.b32.xlu0 %v311, 24
      %v362 = vpop.permute.xlu0 %361
      %363 = vrot.lane.b32.xlu0 %v313, 24
      %v364 = vpop.permute.xlu0 %363
      %365 = vrot.lane.b32.xlu0 %v315, 24
      %v366 = vpop.permute.xlu0 %365
      %367 = vrot.lane.b32.xlu0 %v317, 24
      %v368 = vpop.permute.xlu0 %367
      %369 = vrot.lane.b32.xlu0 %v319, 24
      %v370 = vpop.permute.xlu0 %369
      %371 = vrot.lane.b32.xlu0 %v352, 24
      %v372 = vpop.permute.xlu0 %371
      %vm383 = vcmask 1044480
      %v384 = vrot.slane %v223, 3
      %v385 = vrot.slane %v224, 3
      %v386 = vsel %vm383, %v384, %v385
      %v387 = vrot.slane %v225, 3
      %v388 = vsel %vm383, %v385, %v387
      %v389 = vrot.slane %v226, 3
      %v390 = vsel %vm383, %v387, %v389
      %v391 = vrot.slane %v227, 3
      %v392 = vsel %vm383, %v389, %v391
      %v393 = vrot.slane %v228, 3
      %v394 = vsel %vm383, %v391, %v393
      %v395 = vrot.slane %v229, 3
      %v396 = vsel %vm383, %v393, %v395
      %v397 = vrot.slane %v230, 3
      %v398 = vsel %vm383, %v395, %v397
      %v399 = vrot.slane %v231, 3
      %v400 = vsel %vm383, %v397, %v399
      %v401 = vrot.slane %v232, 3
      %v402 = vsel %vm383, %v399, %v401
      %v403 = vrot.slane %v233, 3
      %v404 = vsel %vm383, %v401, %v403
      %405 = vrot.lane.b32.xlu0 %v386, 32
      %v406 = vpop.permute.xlu0 %405
      %407 = vrot.lane.b32.xlu0 %v388, 32
      %v408 = vpop.permute.xlu0 %407
      %409 = vrot.lane.b32.xlu0 %v390, 32
      %v410 = vpop.permute.xlu0 %409
      %411 = vrot.lane.b32.xlu0 %v392, 32
      %v412 = vpop.permute.xlu0 %411
      %413 = vrot.lane.b32.xlu0 %v394, 32
      %v414 = vpop.permute.xlu0 %413
      %415 = vrot.lane.b32.xlu0 %v396, 32
      %v416 = vpop.permute.xlu0 %415
      %417 = vrot.lane.b32.xlu0 %v398, 32
      %v418 = vpop.permute.xlu0 %417
      %419 = vrot.lane.b32.xlu0 %v400, 32
      %v420 = vpop.permute.xlu0 %419
      %421 = vrot.lane.b32.xlu0 %v402, 32
      %v422 = vpop.permute.xlu0 %421
      %423 = vrot.lane.b32.xlu0 %v404, 32
      %v424 = vpop.permute.xlu0 %423
      %vm435 = vcmask 1043456
      %v436 = vrot.slane %v223, 4
      %v437 = vrot.slane %v224, 4
      %v438 = vsel %vm435, %v436, %v437
      %v439 = vrot.slane %v225, 4
      %v440 = vsel %vm435, %v437, %v439
      %v441 = vrot.slane %v226, 4
      %v442 = vsel %vm435, %v439, %v441
      %v443 = vrot.slane %v227, 4
      %v444 = vsel %vm435, %v441, %v443
      %v445 = vrot.slane %v228, 4
      %v446 = vsel %vm435, %v443, %v445
      %v447 = vrot.slane %v229, 4
      %v448 = vsel %vm435, %v445, %v447
      %v449 = vrot.slane %v230, 4
      %v450 = vsel %vm435, %v447, %v449
      %v451 = vrot.slane %v231, 4
      %v452 = vsel %vm435, %v449, %v451
      %v453 = vrot.slane %v232, 4
      %v454 = vsel %vm435, %v451, %v453
      %v455 = vrot.slane %v233, 4
      %v456 = vsel %vm435, %v453, %v455
      %457 = vrot.lane.b32.xlu0 %v438, 40
      %v458 = vpop.permute.xlu0 %457
      %459 = vrot.lane.b32.xlu0 %v440, 40
      %v460 = vpop.permute.xlu0 %459
      %461 = vrot.lane.b32.xlu0 %v442, 40
      %v462 = vpop.permute.xlu0 %461
      %463 = vrot.lane.b32.xlu0 %v444, 40
      %v464 = vpop.permute.xlu0 %463
      %465 = vrot.lane.b32.xlu0 %v446, 40
      %v466 = vpop.permute.xlu0 %465
      %467 = vrot.lane.b32.xlu0 %v448, 40
      %v468 = vpop.permute.xlu0 %467
      %469 = vrot.lane.b32.xlu0 %v450, 40
      %v470 = vpop.permute.xlu0 %469
      %471 = vrot.lane.b32.xlu0 %v452, 40
      %v472 = vpop.permute.xlu0 %471
      %473 = vrot.lane.b32.xlu0 %v454, 40
      %v474 = vpop.permute.xlu0 %473
      %475 = vrot.lane.b32.xlu0 %v456, 40
      %v476 = vpop.permute.xlu0 %475
      %v488 = vrot.slane %v234, 4
      %v489 = vsel %vm435, %v455, %v488
      %490 = vrot.lane.b32.xlu0 %v440, 48
      %v491 = vpop.permute.xlu0 %490
      %492 = vrot.lane.b32.xlu0 %v442, 48
      %v493 = vpop.permute.xlu0 %492
      %494 = vrot.lane.b32.xlu0 %v444, 48
      %v495 = vpop.permute.xlu0 %494
      %496 = vrot.lane.b32.xlu0 %v446, 48
      %v497 = vpop.permute.xlu0 %496
      %498 = vrot.lane.b32.xlu0 %v448, 48
      %v499 = vpop.permute.xlu0 %498
      %500 = vrot.lane.b32.xlu0 %v450, 48
      %v501 = vpop.permute.xlu0 %500
      %502 = vrot.lane.b32.xlu0 %v452, 48
      %v503 = vpop.permute.xlu0 %502
      %504 = vrot.lane.b32.xlu0 %v454, 48
      %v505 = vpop.permute.xlu0 %504
      %506 = vrot.lane.b32.xlu0 %v456, 48
      %v507 = vpop.permute.xlu0 %506
      %508 = vrot.lane.b32.xlu0 %v489, 48
      %v509 = vpop.permute.xlu0 %508
      %vm520 = vcmask 1042432
      %v521 = vrot.slane %v224, 5
      %v522 = vrot.slane %v225, 5
      %v523 = vsel %vm520, %v521, %v522
      %v524 = vrot.slane %v226, 5
      %v525 = vsel %vm520, %v522, %v524
      %v526 = vrot.slane %v227, 5
      %v527 = vsel %vm520, %v524, %v526
      %v528 = vrot.slane %v228, 5
      %v529 = vsel %vm520, %v526, %v528
      %v530 = vrot.slane %v229, 5
      %v531 = vsel %vm520, %v528, %v530
      %v532 = vrot.slane %v230, 5
      %v533 = vsel %vm520, %v530, %v532
      %v534 = vrot.slane %v231, 5
      %v535 = vsel %vm520, %v532, %v534
      %v536 = vrot.slane %v232, 5
      %v537 = vsel %vm520, %v534, %v536
      %v538 = vrot.slane %v233, 5
      %v539 = vsel %vm520, %v536, %v538
      %v540 = vrot.slane %v234, 5
      %v541 = vsel %vm520, %v538, %v540
      %542 = vrot.lane.b32.xlu0 %v523, 56
      %v543 = vpop.permute.xlu0 %542
      %544 = vrot.lane.b32.xlu0 %v525, 56
      %v545 = vpop.permute.xlu0 %544
      %546 = vrot.lane.b32.xlu0 %v527, 56
      %v547 = vpop.permute.xlu0 %546
      %548 = vrot.lane.b32.xlu0 %v529, 56
      %v549 = vpop.permute.xlu0 %548
      %550 = vrot.lane.b32.xlu0 %v531, 56
      %v551 = vpop.permute.xlu0 %550
      %552 = vrot.lane.b32.xlu0 %v533, 56
      %v553 = vpop.permute.xlu0 %552
      %554 = vrot.lane.b32.xlu0 %v535, 56
      %v555 = vpop.permute.xlu0 %554
      %556 = vrot.lane.b32.xlu0 %v537, 56
      %v557 = vpop.permute.xlu0 %556
      %558 = vrot.lane.b32.xlu0 %v539, 56
      %v559 = vpop.permute.xlu0 %558
      %560 = vrot.lane.b32.xlu0 %v541, 56
      %v561 = vpop.permute.xlu0 %560
      %vm572 = vcmask 1041408
      %v573 = vrot.slane %v224, 6
      %v574 = vrot.slane %v225, 6
      %v575 = vsel %vm572, %v573, %v574
      %v576 = vrot.slane %v226, 6
      %v577 = vsel %vm572, %v574, %v576
      %v578 = vrot.slane %v227, 6
      %v579 = vsel %vm572, %v576, %v578
      %v580 = vrot.slane %v228, 6
      %v581 = vsel %vm572, %v578, %v580
      %v582 = vrot.slane %v229, 6
      %v583 = vsel %vm572, %v580, %v582
      %v584 = vrot.slane %v230, 6
      %v585 = vsel %vm572, %v582, %v584
      %v586 = vrot.slane %v231, 6
      %v587 = vsel %vm572, %v584, %v586
      %v588 = vrot.slane %v232, 6
      %v589 = vsel %vm572, %v586, %v588
      %v590 = vrot.slane %v233, 6
      %v591 = vsel %vm572, %v588, %v590
      %v592 = vrot.slane %v234, 6
      %v593 = vsel %vm572, %v590, %v592
      %594 = vrot.lane.b32.xlu0 %v575, 64
      %v595 = vpop.permute.xlu0 %594
      %596 = vrot.lane.b32.xlu0 %v577, 64
      %v597 = vpop.permute.xlu0 %596
      %598 = vrot.lane.b32.xlu0 %v579, 64
      %v599 = vpop.permute.xlu0 %598
      %600 = vrot.lane.b32.xlu0 %v581, 64
      %v601 = vpop.permute.xlu0 %600
      %602 = vrot.lane.b32.xlu0 %v583, 64
      %v603 = vpop.permute.xlu0 %602
      %604 = vrot.lane.b32.xlu0 %v585, 64
      %v605 = vpop.permute.xlu0 %604
      %606 = vrot.lane.b32.xlu0 %v587, 64
      %v607 = vpop.permute.xlu0 %606
      %608 = vrot.lane.b32.xlu0 %v589, 64
      %v609 = vpop.permute.xlu0 %608
      %610 = vrot.lane.b32.xlu0 %v591, 64
      %v611 = vpop.permute.xlu0 %610
      %612 = vrot.lane.b32.xlu0 %v593, 64
      %v613 = vpop.permute.xlu0 %612
      %vm624 = vcmask 64512
      %v625 = vsel %vm624, %v222, %v269
      %v626 = vsel %vm624, %v223, %v271
      %v627 = vsel %vm624, %v224, %v273
      %v628 = vsel %vm624, %v225, %v275
      %v629 = vsel %vm624, %v226, %v277
      %v630 = vsel %vm624, %v227, %v279
      %v631 = vsel %vm624, %v228, %v281
      %v632 = vsel %vm624, %v229, %v283
      %v633 = vsel %vm624, %v230, %v285
      %v634 = vsel %vm624, %v231, %v287
      %vm635 = vcmask 130048
      %v636 = vsel %vm635, %v625, %v321
      %v637 = vsel %vm635, %v626, %v323
      %v638 = vsel %vm635, %v627, %v325
      %v639 = vsel %vm635, %v628, %v327
      %v640 = vsel %vm635, %v629, %v329
      %v641 = vsel %vm635, %v630, %v331
      %v642 = vsel %vm635, %v631, %v333
      %v643 = vsel %vm635, %v632, %v335
      %v644 = vsel %vm635, %v633, %v337
      %v645 = vsel %vm635, %v634, %v339
      %vm646 = vcmask 195584
      %v647 = vsel %vm646, %v636, %v354
      %v648 = vsel %vm646, %v637, %v356
      %v649 = vsel %vm646, %v638, %v358
      %v650 = vsel %vm646, %v639, %v360
      %v651 = vsel %vm646, %v640, %v362
      %v652 = vsel %vm646, %v641, %v364
      %v653 = vsel %vm646, %v642, %v366
      %v654 = vsel %vm646, %v643, %v368
      %v655 = vsel %vm646, %v644, %v370
      %v656 = vsel %vm646, %v645, %v372
      %vm657 = vcmask 261120
      %v658 = vsel %vm657, %v647, %v406
      %v659 = vsel %vm657, %v648, %v408
      %v660 = vsel %vm657, %v649, %v410
      %v661 = vsel %vm657, %v650, %v412
      %v662 = vsel %vm657, %v651, %v414
      %v663 = vsel %vm657, %v652, %v416
      %v664 = vsel %vm657, %v653, %v418
      %v665 = vsel %vm657, %v654, %v420
      %v666 = vsel %vm657, %v655, %v422
      %v667 = vsel %vm657, %v656, %v424
      %vm668 = vcmask 326656
      %v669 = vsel %vm668, %v658, %v458
      %v670 = vsel %vm668, %v659, %v460
      %v671 = vsel %vm668, %v660, %v462
      %v672 = vsel %vm668, %v661, %v464
      %v673 = vsel %vm668, %v662, %v466
      %v674 = vsel %vm668, %v663, %v468
      %v675 = vsel %vm668, %v664, %v470
      %v676 = vsel %vm668, %v665, %v472
      %v677 = vsel %vm668, %v666, %v474
      %v678 = vsel %vm668, %v667, %v476
      %vm679 = vcmask 392192
      %v680 = vsel %vm679, %v669, %v491
      %v681 = vsel %vm679, %v670, %v493
      %v682 = vsel %vm679, %v671, %v495
      %v683 = vsel %vm679, %v672, %v497
      %v684 = vsel %vm679, %v673, %v499
      %v685 = vsel %vm679, %v674, %v501
      %v686 = vsel %vm679, %v675, %v503
      %v687 = vsel %vm679, %v676, %v505
      %v688 = vsel %vm679, %v677, %v507
      %v689 = vsel %vm679, %v678, %v509
      %vm690 = vcmask 457728
      %v691 = vsel %vm690, %v680, %v543
      %v692 = vsel %vm690, %v681, %v545
      %v693 = vsel %vm690, %v682, %v547
      %v694 = vsel %vm690, %v683, %v549
      %v695 = vsel %vm690, %v684, %v551
      %v696 = vsel %vm690, %v685, %v553
      %v697 = vsel %vm690, %v686, %v555
      %v698 = vsel %vm690, %v687, %v557
      %v699 = vsel %vm690, %v688, %v559
      %v700 = vsel %vm690, %v689, %v561
      %vm701 = vcmask 523264
      %v702 = vsel %vm701, %v691, %v595
      %v703 = vsel %vm701, %v692, %v597
      %v704 = vsel %vm701, %v693, %v599
      %v705 = vsel %vm701, %v694, %v601
      %v706 = vsel %vm701, %v695, %v603
      %v707 = vsel %vm701, %v696, %v605
      %v708 = vsel %vm701, %v697, %v607
      %v709 = vsel %vm701, %v698, %v609
      %v710 = vsel %vm701, %v699, %v611
      %v711 = vsel %vm701, %v700, %v613
      %vm712 = vcmask 588800
      %v714 = vsel %vm712, %v702, 0
      %v717 = vsel %vm712, %v703, 0
      %v720 = vsel %vm712, %v704, 0
      %v723 = vsel %vm712, %v705, 0
      %v726 = vsel %vm712, %v706, 0
      %v729 = vsel %vm712, %v707, 0
      %v732 = vsel %vm712, %v708, 0
      %v735 = vsel %vm712, %v709, 0
      %v738 = vsel %vm712, %v710, 0
      %v741 = vsel %vm712, %v711, 0
      %743 = vmatprep.subr.mxu0 0.0
      %744 = vmatpush1.msra.mxu0 0.0
      %745 = vmatprep.subr.mxu0 0.0
      %746 = vmatpush1.msra.mxu0 0.0
      %747 = vmatprep.subr.mxu0 0.0
      %748 = vmatpush1.msra.mxu0 0.0
      %749 = vmatprep.subr.mxu0 0.0
      %750 = vmatpush1.msra.mxu0 0.0
      %751 = vmatprep.subr.mxu0 0.0
      %752 = vmatpush1.msra.mxu0 0.0
      %753 = vmatprep.subr.mxu0 0.0
      %754 = vmatpush1.msra.mxu0 0.0
      %755 = vmatprep.subr.mxu0 0.0
      %756 = vmatpush1.msra.mxu0 0.0
      %757 = vmatprep.subr.mxu0 0.0
      %758 = vmatpush1.msra.mxu0 %v206
      %759 = vmatprep.subr.mxu0 0.0
      %760 = vmatpush1.msra.mxu0 %v205
      %761 = vmatprep.subr.mxu0 0.0
      %762 = vmatpush1.msra.mxu0 %v204
      %763 = vmatprep.subr.mxu0 0.0
      %764 = vmatpush1.msra.mxu0 %v203
      %765 = vmatprep.subr.mxu0 0.0
      %766 = vmatpush1.msra.mxu0 %v202
      %767 = vmatprep.subr.mxu0 0.0
      %768 = vmatpush1.msra.mxu0 %v201
      %769 = vmatprep.subr.mxu0 0.0
      %770 = vmatpush1.msra.mxu0 %v200
      %771 = vmatprep.subr.mxu0 0.0
      %772 = vmatpush1.msra.mxu0 %v199
      %773 = vmatprep.subr.mxu0 0.0
      %774 = vmatpush1.msra.mxu0 %v198
      %775 = vmatprep.subr.mxu0 0.0
      %776 = vmatpush2.msra.mxu0 0.0
      %777 = vmatprep.subr.mxu0 0.0
      %778 = vmatpush2.msra.mxu0 0.0
      %779 = vmatprep.subr.mxu0 0.0
      %780 = vmatpush2.msra.mxu0 0.0
      %781 = vmatprep.subr.mxu0 0.0
      %782 = vmatpush2.msra.mxu0 0.0
      %783 = vmatprep.subr.mxu0 0.0
      %784 = vmatpush2.msra.mxu0 0.0
      %785 = vmatprep.subr.mxu0 0.0
      %786 = vmatpush2.msra.mxu0 0.0
      %787 = vmatprep.subr.mxu0 0.0
      %788 = vmatpush2.msra.mxu0 0.0
      %789 = vmatprep.subr.mxu0 0.0
      %790 = vmatpush2.msra.mxu0 0.0
      %791 = vmatprep.subr.mxu0 0.0
      %792 = vmatpush2.msra.mxu0 0.0
      %793 = vmatprep.subr.mxu0 0.0
      %794 = vmatpush2.msra.mxu0 0.0
      %795 = vmatprep.subr.mxu0 0.0
      %796 = vmatpush2.msra.mxu0 0.0
      %797 = vmatprep.subr.mxu0 0.0
      %798 = vmatpush2.msra.mxu0 0.0
      %799 = vmatprep.subr.mxu0 0.0
      %800 = vmatpush2.msra.mxu0 0.0
      %801 = vmatprep.subr.mxu0 0.0
      %802 = vmatpush2.msra.mxu0 0.0
      %803 = vmatprep.subr.mxu0 0.0
      %804 = vmatpush2.msra.mxu0 0.0
      %805 = vmatprep.subr.mxu0 0.0
      %806 = vmatpush2.msra.mxu0 0.0
      %807 = vmatprep.mubr.f32.mxu0 0.0
      %808 = vmatmul.mubr.f32.gmra.mxu0 %v714
      %v809 = vpop.f32.mrf.mxu0
      %v810 = vadd.f32 0.0, %v809
      %v811 = vpop.f32.mrf.mxu0
      %812 = vmatprep.mubr.f32.mxu0 0.0
      %813 = vmatmul.mubr.f32.gmra.mxu0 %v717
      %v814 = vpop.f32.mrf.mxu0
      %v815 = vadd.f32 0.0, %v814
      %v816 = vpop.f32.mrf.mxu0
      %817 = vmatprep.mubr.f32.mxu0 0.0
      %818 = vmatmul.mubr.f32.gmra.mxu0 %v720
      %v819 = vpop.f32.mrf.mxu0
      %v820 = vadd.f32 0.0, %v819
      %v821 = vpop.f32.mrf.mxu0
      %822 = vmatprep.mubr.f32.mxu0 0.0
      %823 = vmatmul.mubr.f32.gmra.mxu0 %v723
      %v824 = vpop.f32.mrf.mxu0
      %v825 = vadd.f32 0.0, %v824
      %v826 = vpop.f32.mrf.mxu0
      %827 = vmatprep.mubr.f32.mxu0 0.0
      %828 = vmatmul.mubr.f32.gmra.mxu0 %v726
      %v829 = vpop.f32.mrf.mxu0
      %v830 = vadd.f32 0.0, %v829
      %v831 = vpop.f32.mrf.mxu0
      %832 = vmatprep.mubr.f32.mxu0 0.0
      %833 = vmatmul.mubr.f32.gmra.mxu0 %v729
      %v834 = vpop.f32.mrf.mxu0
      %v835 = vadd.f32 0.0, %v834
      %v836 = vpop.f32.mrf.mxu0
      %837 = vmatprep.mubr.f32.mxu0 0.0
      %838 = vmatmul.mubr.f32.gmra.mxu0 %v732
      %v839 = vpop.f32.mrf.mxu0
      %v840 = vadd.f32 0.0, %v839
      %v841 = vpop.f32.mrf.mxu0
      %842 = vmatprep.mubr.f32.mxu0 0.0
      %843 = vmatmul.mubr.f32.gmra.mxu0 %v735
      %v844 = vpop.f32.mrf.mxu0
      %v845 = vadd.f32 0.0, %v844
      %v846 = vpop.f32.mrf.mxu0
      %847 = vmatprep.mubr.f32.mxu0 0.0
      %848 = vmatmul.mubr.f32.gmra.mxu0 %v738
      %v849 = vpop.f32.mrf.mxu0
      %v850 = vadd.f32 0.0, %v849
      %v851 = vpop.f32.mrf.mxu0
      %852 = vmatprep.mubr.f32.mxu0 0.0
      %853 = vmatmul.mubr.f32.gmra.mxu0 %v741
      %v854 = vpop.f32.mrf.mxu0
      %v855 = vadd.f32 0.0, %v854
      %v856 = vpop.f32.mrf.mxu0
      %857 = vdwg.mxu0
      %v859 = vlaneseq
      %v860 = vshrl.u32 %v859, 7
      %v861 = vsub.s32 0, %v860
      %v862 = vrot.slane %v207, %v861
      %v864 = vmul.f32 %v810, %v862
      %v865 = vmul.f32 %v815, %v862
      %v866 = vmul.f32 %v820, %v862
      %v867 = vmul.f32 %v825, %v862
      %v868 = vmul.f32 %v830, %v862
      %v869 = vmul.f32 %v835, %v862
      %v870 = vmul.f32 %v840, %v862
      %v871 = vmul.f32 %v845, %v862
      %v872 = vmul.f32 %v850, %v862
      %v873 = vmul.f32 %v855, %v862
      %v875 = vlaneseq
      %v876 = vshrl.u32 %v875, 7
      %v877 = vsub.s32 0, %v876
      %v878 = vrot.slane %v208, %v877
      %v880 = vadd.f32 %v864, %v878
      %v881 = vadd.f32 %v865, %v878
      %v882 = vadd.f32 %v866, %v878
      %v883 = vadd.f32 %v867, %v878
      %v884 = vadd.f32 %v868, %v878
      %v885 = vadd.f32 %v869, %v878
      %v886 = vadd.f32 %v870, %v878
      %v887 = vadd.f32 %v871, %v878
      %v888 = vadd.f32 %v872, %v878
      %v889 = vadd.f32 %v873, %v878
      %890 = vst.msk [vmem:[%s197] sm:$0xff] %vm624, %v880
      %891 = vst.msk [vmem:[%s197 + $0x8] sm:$0xff] %vm624, %v881
      %892 = vst.msk [vmem:[%s197 + $0x10] sm:$0xff] %vm624, %v882
      %893 = vst.msk [vmem:[%s197 + $0x18] sm:$0xff] %vm624, %v883
      %894 = vst.msk [vmem:[%s197 + $0x20] sm:$0xff] %vm624, %v884
      %895 = vst.msk [vmem:[%s197 + $0x28] sm:$0xff] %vm624, %v885
      %896 = vst.msk [vmem:[%s197 + $0x30] sm:$0xff] %vm624, %v886
      %897 = vst.msk [vmem:[%s197 + $0x38] sm:$0xff] %vm624, %v887
      %898 = vst.msk [vmem:[%s197 + $0x40] sm:$0xff] %vm624, %v888
      %899 = vst.msk [vmem:[%s197 + $0x48] sm:$0xff] %vm624, %v889
      %p900 = scmp.lt.s32.totalorder %s15, 1
      %s901 = scalar_select %p900, %s15, 1
      %s902 = smul.addr %s901, 10
      %s903 = smul.addr %s902, 8
      %s904 = scalar_lea.vmem %s4, %s903
      // Predicated region
      $region37: #{abf_forward.3} parent=35 // pred_check
        %p905 = pneg %p122
      $region38: #{abf_forward.3} parent=35 // pred_check_branch
        %907 = sbr.rel (%p905) target = $region40
      $region39: #{abf_forward.3} parent=35 // pred_region
        _
      $region40: #{abf_forward.3} parent=35 // pred_fallthru
        _
    $region36: #{abf_forward.3} parent=5 // pred_fallthru
      _
    %p908 = scmp.le.s32.totalorder 2, %s10
    // Predicated region
    $region41: #{abf_forward.3} parent=5 // pred_check
      %p909 = pneg %p908
    $region42: #{abf_forward.3} parent=5 // pred_check_branch
      %911 = sbr.rel (%p909) target = $region44
    $region43: #{abf_forward.3} parent=5 // pred_region
      %s912 = ssub.s32 %s10, 2
      // Predicated region
      $region45: #{abf_forward.3} parent=43 // pred_check
        %p913 = pneg %p128
      $region46: #{abf_forward.3} parent=43 // pred_check_branch
        %915 = sbr.rel (%p913) target = $region48
      $region47: #{abf_forward.3} parent=43 // pred_region
        %p916 = scmp.lt.s32.totalorder %s16, 1
        %s917 = scalar_select %p916, %s16, 1
        %s918 = smul.addr %s917, 10
        %s919 = smul.addr %s918, 8
        %s920 = scalar_lea.vmem %s4, %s919
      $region48: #{abf_forward.3} parent=43 // pred_fallthru
        _
    $region44: #{abf_forward.3} parent=5 // pred_fallthru
      _
  $region6: #{abf_forward.3} parent=0 // loop_footer
    %s14 = sadd.s32 1, %s10
  $region7: #{abf_forward.3} parent=0 // loop_footer_branch
    %9 = sbr.rel target = $region3
  $region8: #{abf_forward.3} parent=0 // loop_exit
    _

</llo_original>
